<compile_context>
chip_gen: v7x
topology: tpu7x:2x2x1
jax: 0.10.0
libtpu: 0.0.40
codegen_flags: <defaults>
</compile_context>

<pallas_src>
import jax
import jax.numpy as jnp
from jax.experimental import pallas as pl
from jax.experimental.pallas import tpu as pltpu


def _inverse_mask_kernel(
    now_ref, last_ref,
    wa1_ref, ba1_ref, wa2_ref, ba2_ref, wa3_ref, ba3_ref,
    we1d_ref, we1n_ref, be1_ref, we2_ref, be2_ref, we3_ref, be3_ref,
    plp_ref, ent_ref, plpe_ref):
    """One batch tile: TB samples x G grid cells processed as [TB*G, P] rows."""
    tb, g_cells, n_act = plpe_ref.shape          # static block shape

    inv255 = jnp.float32(1.0 / 255.0)
    now = now_ref[...] * inv255                  # [TB*G, P] conved_now patches
    diff = now - last_ref[...] * inv255          # conved_now - conved_last

    # bf16 operands / f32 accumulation on the MXU.
    now_b = now.astype(jnp.bfloat16)
    diff_b = diff.astype(jnp.bfloat16)

    # ---- mlp_alpha(now): Linear(P,64) ReLU Linear(64,64) ReLU Linear(64,1) ---
    h = jnp.dot(now_b, wa1_ref[...],
                preferred_element_type=jnp.float32) + ba1_ref[...]
    h = jnp.maximum(h, 0.0)
    h = jnp.dot(h.astype(jnp.bfloat16), wa2_ref[...],
                preferred_element_type=jnp.float32) + ba2_ref[...]
    h = jnp.maximum(h, 0.0)                                    # [TB*G, 64]
    h3 = h.reshape(tb, g_cells, h.shape[-1])                   # [TB, G, 64]
    # Final Linear(64 -> 1) as a VPU multiply + lane reduce.
    alpha_logit = (jnp.sum(h3 * wa3_ref[...], axis=-1, keepdims=True)
                   + ba3_ref[...])                             # [TB, G, 1]

    # ---- mlp_e(concat([diff, now])): concat folded into split W1 halves -----
    z = (jnp.dot(diff_b, we1d_ref[...], preferred_element_type=jnp.float32)
         + jnp.dot(now_b, we1n_ref[...], preferred_element_type=jnp.float32)
         + be1_ref[...])
    z = jnp.maximum(z, 0.0)
    z = jnp.dot(z.astype(jnp.bfloat16), we2_ref[...],
                preferred_element_type=jnp.float32) + be2_ref[...]
    z = jnp.maximum(z, 0.0)
    e = jnp.dot(z.astype(jnp.bfloat16), we3_ref[...],
                preferred_element_type=jnp.float32) + be3_ref[...]  # [TB*G, A]
    e3 = e.reshape(tb, g_cells, n_act)                              # [TB, G, A]

    # ---- predicted_action_log_probs_each = log_softmax(e, over actions) -----
    e_max = jnp.max(e3, axis=-1, keepdims=True)
    e_sh = e3 - e_max
    e_lse = jnp.log(jnp.sum(jnp.exp(e_sh), axis=-1, keepdims=True))
    plpe_ref[...] = e_sh - e_lse

    # ---- alpha = softmax(alpha_logits over the G grid cells, per sample) ----
    a_max = jnp.max(alpha_logit, axis=1, keepdims=True)
    a_sh = alpha_logit - a_max
    a_lse = jnp.log(jnp.sum(jnp.exp(a_sh), axis=1, keepdims=True))
    log_alpha = a_sh - a_lse                                    # [TB, G, 1]
    alpha = jnp.exp(log_alpha)

    # ---- predicted_action_log_probs = log_softmax(sum_g alpha_g * e_g) ------
    w = jnp.sum(alpha * e3, axis=1)                             # [TB, A]
    w_max = jnp.max(w, axis=-1, keepdims=True)
    w_sh = w - w_max
    w_lse = jnp.log(jnp.sum(jnp.exp(w_sh), axis=-1, keepdims=True))
    plp_ref[...] = w_sh - w_lse

    # ---- per-sample entropy term; the batch mean happens in the wrapper -----
    ent_ref[...] = jnp.sum(alpha * log_alpha, axis=1)           # [TB, 1]


def extract_patches(states, num_grid, size_grid):
    """[B, 1, 84, 84] -> [B, G, P]; cell order i*num_grid + j, row-major pixels
    inside each cell (matches flatten(slice_grid(states, i, j)))."""
    B = states.shape[0]
    x = states.reshape(B, num_grid, size_grid, num_grid, size_grid)
    x = jnp.transpose(x, (0, 1, 3, 2, 4))
    return x.reshape(B, num_grid * num_grid,
                     size_grid * size_grid).astype(jnp.float32)


def inverse_mask_forward(last_states, now_states, params, num_grid,
                         predicted_action_space, batch_tile=8):
    """Fused forward: returns (predicted_action_log_probs [B,A],
    loss_ent scalar, predicted_action_log_probs_each [B,G,A])."""
    B = now_states.shape[0]
    size_grid = 84 // num_grid
    G = num_grid * num_grid
    P = size_grid * size_grid
    A = predicted_action_space

    TB = min(batch_tile, B)
    n_tiles = pl.cdiv(B, TB)
    B_pad = n_tiles * TB

    p_now = extract_patches(now_states, num_grid, size_grid).reshape(B * G, P)
    p_last = extract_patches(last_states, num_grid, size_grid).reshape(B * G, P)
    if B_pad != B:
        pad = ((0, (B_pad - B) * G), (0, 0))
        p_now = jnp.pad(p_now, pad)
        p_last = jnp.pad(p_last, pad)

    def patch_spec():
        return pl.BlockSpec((TB * G, P), lambda b: (b, 0))

    def weight_spec(shape):
        return pl.BlockSpec(shape, lambda b: (0, 0))

    in_specs = [
        patch_spec(), patch_spec(),
        weight_spec((P, 64)), weight_spec((1, 64)),
        weight_spec((64, 64)), weight_spec((1, 64)),
        weight_spec((1, 64)), weight_spec((1, 1)),
        weight_spec((P, 256)), weight_spec((P, 256)), weight_spec((1, 256)),
        weight_spec((256, 128)), weight_spec((1, 128)),
        weight_spec((128, A)), weight_spec((1, A)),
    ]
    out_specs = (
        pl.BlockSpec((TB, A), lambda b: (b, 0)),
        pl.BlockSpec((TB, 1), lambda b: (b, 0)),
        pl.BlockSpec((TB, G, A), lambda b: (b, 0, 0)),
    )
    out_shape = (
        jax.ShapeDtypeStruct((B_pad, A), jnp.float32),
        jax.ShapeDtypeStruct((B_pad, 1), jnp.float32),
        jax.ShapeDtypeStruct((B_pad, G, A), jnp.float32),
    )

    plp, ent_b, plpe = pl.pallas_call(
        _inverse_mask_kernel,
        grid=(n_tiles,),
        in_specs=in_specs,
        out_specs=out_specs,
        out_shape=out_shape,
        compiler_params=pltpu.CompilerParams(
            dimension_semantics=("parallel",)),
    )(p_now, p_last,
      params["wa1"], params["ba1"], params["wa2"], params["ba2"],
      params["wa3"], params["ba3"],
      params["we1d"], params["we1n"], params["be1"],
      params["we2"], params["be2"], params["we3"], params["be3"])

    predicted_action_log_probs = plp[:B]
    loss_ent = jnp.mean(ent_b[:B, 0])
    predicted_action_log_probs_each = plpe[:B]
    return predicted_action_log_probs, loss_ent, predicted_action_log_probs_each


def init_params(key, num_grid, predicted_action_space):
    """Orthogonal weights (relu gain on hidden layers), small random biases.
    Matmul weights stored as bf16 [in, out]; the concat'd mlp_e first layer is
    split into its (diff, now) halves; the final mlp_alpha Linear(64,1) is
    stored as a [1, 64] row for the in-kernel VPU reduce."""
    size_grid = 84 // num_grid
    P = size_grid * size_grid
    A = predicted_action_space
    relu_gain = 2.0 ** 0.5
    ortho = jax.nn.initializers.orthogonal
    ks = jax.random.split(key, 13)

    def w(k, shape, gain):
        return ortho(scale=gain)(k, shape, jnp.float32)

    def b(k, n):
        return 0.1 * jax.random.normal(k, (1, n), jnp.float32)

    return {
        # mlp_alpha: Linear(P,64) ReLU Linear(64,64) ReLU Linear(64,1)
        "wa1": w(ks[0], (P, 64), relu_gain).astype(jnp.bfloat16),
        "ba1": b(ks[1], 64),
        "wa2": w(ks[2], (64, 64), relu_gain).astype(jnp.bfloat16),
        "ba2": b(ks[3], 64),
        "wa3": w(ks[4], (64, 1), 1.0).reshape(1, 64),   # kept f32 (VPU reduce)
        "ba3": b(ks[5], 1),
        # mlp_e: Linear(2P,256) ReLU Linear(256,128) ReLU Linear(128,A)
        "we1d": w(ks[6], (P, 256), relu_gain).astype(jnp.bfloat16),
        "we1n": w(ks[7], (P, 256), relu_gain).astype(jnp.bfloat16),
        "be1": b(ks[8], 256),
        "we2": w(ks[9], (256, 128), relu_gain).astype(jnp.bfloat16),
        "be2": b(ks[10], 128),
        "we3": w(ks[11], (128, A), 1.0).astype(jnp.bfloat16),
        "be3": b(ks[12], A),
    }


def reference_forward(last_states, now_states, params, num_grid,
                      predicted_action_space, cast_bf16):
    """Pure-JAX reference of InverseMaskModel.forward."""
    size_grid = 84 // num_grid
    G = num_grid * num_grid
    A = predicted_action_space
    B = now_states.shape[0]
    pn = extract_patches(now_states, num_grid, size_grid)
    plast = extract_patches(last_states, num_grid, size_grid)
    now = (pn * (1.0 / 255.0)).reshape(B * G, -1)
    diff = now - (plast * (1.0 / 255.0)).reshape(B * G, -1)

    if cast_bf16:
        c = lambda x: x.astype(jnp.bfloat16)
    else:
        c = lambda x: x.astype(jnp.float32)
    dot = lambda x, w: jnp.dot(c(x), c(w), preferred_element_type=jnp.float32)

    h = jax.nn.relu(dot(now, params["wa1"]) + params["ba1"])
    h = jax.nn.relu(dot(h, params["wa2"]) + params["ba2"])
    alogit = (jnp.sum(h * params["wa3"], axis=-1, keepdims=True)
              + params["ba3"]).reshape(B, G)

    g = jax.nn.relu(dot(diff, params["we1d"]) + dot(now, params["we1n"])
                    + params["be1"])
    g = jax.nn.relu(dot(g, params["we2"]) + params["be2"])
    e = (dot(g, params["we3"]) + params["be3"]).reshape(B, G, A)

    log_alpha = jax.nn.log_softmax(alogit, axis=1)
    alpha = jnp.exp(log_alpha)
    plp = jax.nn.log_softmax(jnp.sum(e * alpha[:, :, None], axis=1), axis=1)
    plpe = jax.nn.log_softmax(e, axis=2)
    loss_ent = jnp.mean(jnp.sum(alpha * log_alpha, axis=1))
    return plp, loss_ent, plpe


if __name__ == "__main__":
    B = 2
    NUM_GRID = 4          # size_grid = 21, G = 16 cells per 84x84 frame
    ACTION_SPACE = 6      # predicted_action_space

    key = jax.random.PRNGKey(0)
    k_last, k_now, k_params = jax.random.split(key, 3)
    last_states = jax.random.uniform(k_last, (B, 1, 84, 84), jnp.float32,
                                     0.0, 255.0)
    now_states = jax.random.uniform(k_now, (B, 1, 84, 84), jnp.float32,
                                    0.0, 255.0)
    params = init_params(k_params, NUM_GRID, ACTION_SPACE)

    plp, loss_ent, plpe = inverse_mask_forward(
        last_states, now_states, params, NUM_GRID, ACTION_SPACE)
    jax.block_until_ready((plp, loss_ent, plpe))

    # Tight check vs a pure-JAX reference using the same bf16-operand matmuls.
    r_plp, r_ent, r_plpe = reference_forward(
        last_states, now_states, params, NUM_GRID, ACTION_SPACE, cast_bf16=True)
    assert jnp.allclose(plp, r_plp, atol=5e-3, rtol=5e-3), "plp mismatch (bf16 ref)"
    assert jnp.allclose(plpe, r_plpe, atol=5e-3, rtol=5e-3), "plpe mismatch (bf16 ref)"
    assert jnp.allclose(loss_ent, r_ent, atol=5e-3, rtol=5e-3), "ent mismatch (bf16 ref)"

    # Loose check vs a full-f32-activation reference (bounds bf16 quant error).
    f_plp, f_ent, f_plpe = reference_forward(
        last_states, now_states, params, NUM_GRID, ACTION_SPACE, cast_bf16=False)
    assert jnp.allclose(plp, f_plp, atol=0.1, rtol=0.1), "plp mismatch (f32 ref)"
    assert jnp.allclose(plpe, f_plpe, atol=0.1, rtol=0.1), "plpe mismatch (f32 ref)"
    assert jnp.allclose(loss_ent, f_ent, atol=0.1, rtol=0.1), "ent mismatch (f32 ref)"

    print("KERNEL_OK")
</pallas_src>

<mosaic_0001>
module attributes {stable_mosaic.version = 11 : i64} {
  func.func @_inverse_mask_kernel(%arg0: i32, %arg1: memref<32x441xf32, #tpu.memory_space<vmem>>, %arg2: memref<32x441xf32, #tpu.memory_space<vmem>>, %arg3: memref<441x64xbf16, #tpu.memory_space<vmem>>, %arg4: memref<1x64xf32, #tpu.memory_space<vmem>>, %arg5: memref<64x64xbf16, #tpu.memory_space<vmem>>, %arg6: memref<1x64xf32, #tpu.memory_space<vmem>>, %arg7: memref<1x64xf32, #tpu.memory_space<vmem>>, %arg8: memref<1x1xf32, #tpu.memory_space<vmem>>, %arg9: memref<441x256xbf16, #tpu.memory_space<vmem>>, %arg10: memref<441x256xbf16, #tpu.memory_space<vmem>>, %arg11: memref<1x256xf32, #tpu.memory_space<vmem>>, %arg12: memref<256x128xbf16, #tpu.memory_space<vmem>>, %arg13: memref<1x128xf32, #tpu.memory_space<vmem>>, %arg14: memref<128x6xbf16, #tpu.memory_space<vmem>>, %arg15: memref<1x6xf32, #tpu.memory_space<vmem>>, %arg16: memref<2x6xf32, #tpu.memory_space<vmem>>, %arg17: memref<2x1xf32, #tpu.memory_space<vmem>>, %arg18: memref<2x16x6xf32, #tpu.memory_space<vmem>>) attributes {dimension_semantics = [#tpu.dimension_semantics<parallel>], iteration_bounds = array<i64: 1>, scalar_prefetch = 0 : i64, scratch_operands = 0 : i64, tpu.core_type = #tpu.core_type<tc>, window_params = [{transform_indices = @transform_0, window_bounds = array<i64: 32, 441>}, {transform_indices = @transform_1, window_bounds = array<i64: 32, 441>}, {pipeline_mode = #tpu.pipeline_mode<synchronous>, transform_indices = @transform_2, window_bounds = array<i64: 441, 64>}, {pipeline_mode = #tpu.pipeline_mode<synchronous>, transform_indices = @transform_3, window_bounds = array<i64: 1, 64>}, {pipeline_mode = #tpu.pipeline_mode<synchronous>, transform_indices = @transform_4, window_bounds = array<i64: 64, 64>}, {pipeline_mode = #tpu.pipeline_mode<synchronous>, transform_indices = @transform_5, window_bounds = array<i64: 1, 64>}, {pipeline_mode = #tpu.pipeline_mode<synchronous>, transform_indices = @transform_6, window_bounds = array<i64: 1, 64>}, {pipeline_mode = #tpu.pipeline_mode<synchronous>, transform_indices = @transform_7, window_bounds = array<i64: 1, 1>}, {pipeline_mode = #tpu.pipeline_mode<synchronous>, transform_indices = @transform_8, window_bounds = array<i64: 441, 256>}, {pipeline_mode = #tpu.pipeline_mode<synchronous>, transform_indices = @transform_9, window_bounds = array<i64: 441, 256>}, {pipeline_mode = #tpu.pipeline_mode<synchronous>, transform_indices = @transform_10, window_bounds = array<i64: 1, 256>}, {pipeline_mode = #tpu.pipeline_mode<synchronous>, transform_indices = @transform_11, window_bounds = array<i64: 256, 128>}, {pipeline_mode = #tpu.pipeline_mode<synchronous>, transform_indices = @transform_12, window_bounds = array<i64: 1, 128>}, {pipeline_mode = #tpu.pipeline_mode<synchronous>, transform_indices = @transform_13, window_bounds = array<i64: 128, 6>}, {pipeline_mode = #tpu.pipeline_mode<synchronous>, transform_indices = @transform_14, window_bounds = array<i64: 1, 6>}, {transform_indices = @transform_15, window_bounds = array<i64: 2, 6>}, {transform_indices = @transform_16, window_bounds = array<i64: 2, 1>}, {transform_indices = @transform_17, window_bounds = array<i64: 2, 16, 6>}]} {
    %c0 = arith.constant 0 : index
    %c0_0 = arith.constant 0 : index
    %0 = vector.load %arg1[%c0, %c0_0] : memref<32x441xf32, #tpu.memory_space<vmem>>, vector<32x441xf32>
    %cst = arith.constant 0.00392156886 : f32
    %1 = vector.broadcast %cst : f32 to vector<32x441xf32>
    %2 = arith.mulf %0, %1 : vector<32x441xf32>
    %c0_1 = arith.constant 0 : index
    %c0_2 = arith.constant 0 : index
    %3 = vector.load %arg2[%c0_1, %c0_2] : memref<32x441xf32, #tpu.memory_space<vmem>>, vector<32x441xf32>
    %cst_3 = arith.constant 0.00392156886 : f32
    %4 = vector.broadcast %cst_3 : f32 to vector<32x441xf32>
    %5 = arith.mulf %3, %4 : vector<32x441xf32>
    %6 = arith.subf %2, %5 : vector<32x441xf32>
    %7 = arith.truncf %2 : vector<32x441xf32> to vector<32x441xbf16>
    %8 = arith.truncf %6 : vector<32x441xf32> to vector<32x441xbf16>
    %c0_4 = arith.constant 0 : index
    %c0_5 = arith.constant 0 : index
    %9 = vector.load %arg3[%c0_4, %c0_5] : memref<441x64xbf16, #tpu.memory_space<vmem>>, vector<441x64xbf16>
    %cst_6 = arith.constant dense<0.000000e+00> : vector<32x64xf32>
    %10 = tpu.matmul %7, %9, %cst_6 {dimension_numbers = #tpu.dot_dimension_numbers<[1], [0], [0], [1], [0, 0, 1, 1], [], []>} : vector<32x441xbf16>, vector<441x64xbf16>, vector<32x64xf32> -> vector<32x64xf32>
    %c0_7 = arith.constant 0 : index
    %c0_8 = arith.constant 0 : index
    %11 = vector.load %arg4[%c0_7, %c0_8] : memref<1x64xf32, #tpu.memory_space<vmem>>, vector<1x64xf32>
    %12 = vector.broadcast %11 : vector<1x64xf32> to vector<32x64xf32>
    %13 = arith.addf %10, %12 : vector<32x64xf32>
    %cst_9 = arith.constant 0.000000e+00 : f32
    %14 = vector.broadcast %cst_9 : f32 to vector<32x64xf32>
    %15 = arith.maximumf %13, %14 : vector<32x64xf32>
    %16 = arith.truncf %15 : vector<32x64xf32> to vector<32x64xbf16>
    %c0_10 = arith.constant 0 : index
    %c0_11 = arith.constant 0 : index
    %17 = vector.load %arg5[%c0_10, %c0_11] : memref<64x64xbf16, #tpu.memory_space<vmem>>, vector<64x64xbf16>
    %cst_12 = arith.constant dense<0.000000e+00> : vector<32x64xf32>
    %18 = tpu.matmul %16, %17, %cst_12 {dimension_numbers = #tpu.dot_dimension_numbers<[1], [0], [0], [1], [0, 0, 1, 1], [], []>} : vector<32x64xbf16>, vector<64x64xbf16>, vector<32x64xf32> -> vector<32x64xf32>
    %c0_13 = arith.constant 0 : index
    %c0_14 = arith.constant 0 : index
    %19 = vector.load %arg6[%c0_13, %c0_14] : memref<1x64xf32, #tpu.memory_space<vmem>>, vector<1x64xf32>
    %20 = vector.broadcast %19 : vector<1x64xf32> to vector<32x64xf32>
    %21 = arith.addf %18, %20 : vector<32x64xf32>
    %cst_15 = arith.constant 0.000000e+00 : f32
    %22 = vector.broadcast %cst_15 : f32 to vector<32x64xf32>
    %23 = arith.maximumf %21, %22 : vector<32x64xf32>
    %24 = vector.shape_cast %23 : vector<32x64xf32> to vector<2x16x64xf32>
    %c0_16 = arith.constant 0 : index
    %c0_17 = arith.constant 0 : index
    %25 = vector.load %arg7[%c0_16, %c0_17] : memref<1x64xf32, #tpu.memory_space<vmem>>, vector<1x64xf32>
    %26 = vector.shape_cast %25 : vector<1x64xf32> to vector<1x1x64xf32>
    %27 = vector.broadcast %26 : vector<1x1x64xf32> to vector<2x16x64xf32>
    %28 = arith.mulf %24, %27 : vector<2x16x64xf32>
    %cst_18 = arith.constant dense<0.000000e+00> : vector<2x16xf32>
    %29 = vector.multi_reduction <add>, %28, %cst_18 [2] : vector<2x16x64xf32> to vector<2x16xf32>
    %30 = vector.shape_cast %29 : vector<2x16xf32> to vector<2x16x1xf32>
    %c0_19 = arith.constant 0 : index
    %c0_20 = arith.constant 0 : index
    %31 = vector.load %arg8[%c0_19, %c0_20] : memref<1x1xf32, #tpu.memory_space<vmem>>, vector<1x1xf32>
    %32 = vector.shape_cast %31 : vector<1x1xf32> to vector<1x1x1xf32>
    %33 = vector.broadcast %32 : vector<1x1x1xf32> to vector<2x16x1xf32>
    %34 = arith.addf %30, %33 : vector<2x16x1xf32>
    %c0_21 = arith.constant 0 : index
    %c0_22 = arith.constant 0 : index
    %35 = vector.load %arg9[%c0_21, %c0_22] : memref<441x256xbf16, #tpu.memory_space<vmem>>, vector<441x256xbf16>
    %cst_23 = arith.constant dense<0.000000e+00> : vector<32x256xf32>
    %36 = tpu.matmul %8, %35, %cst_23 {dimension_numbers = #tpu.dot_dimension_numbers<[1], [0], [0], [1], [0, 0, 1, 1], [], []>} : vector<32x441xbf16>, vector<441x256xbf16>, vector<32x256xf32> -> vector<32x256xf32>
    %c0_24 = arith.constant 0 : index
    %c0_25 = arith.constant 0 : index
    %37 = vector.load %arg10[%c0_24, %c0_25] : memref<441x256xbf16, #tpu.memory_space<vmem>>, vector<441x256xbf16>
    %cst_26 = arith.constant dense<0.000000e+00> : vector<32x256xf32>
    %38 = tpu.matmul %7, %37, %cst_26 {dimension_numbers = #tpu.dot_dimension_numbers<[1], [0], [0], [1], [0, 0, 1, 1], [], []>} : vector<32x441xbf16>, vector<441x256xbf16>, vector<32x256xf32> -> vector<32x256xf32>
    %39 = arith.addf %36, %38 : vector<32x256xf32>
    %c0_27 = arith.constant 0 : index
    %c0_28 = arith.constant 0 : index
    %40 = vector.load %arg11[%c0_27, %c0_28] : memref<1x256xf32, #tpu.memory_space<vmem>>, vector<1x256xf32>
    %41 = vector.broadcast %40 : vector<1x256xf32> to vector<32x256xf32>
    %42 = arith.addf %39, %41 : vector<32x256xf32>
    %cst_29 = arith.constant 0.000000e+00 : f32
    %43 = vector.broadcast %cst_29 : f32 to vector<32x256xf32>
    %44 = arith.maximumf %42, %43 : vector<32x256xf32>
    %45 = arith.truncf %44 : vector<32x256xf32> to vector<32x256xbf16>
    %c0_30 = arith.constant 0 : index
    %c0_31 = arith.constant 0 : index
    %46 = vector.load %arg12[%c0_30, %c0_31] : memref<256x128xbf16, #tpu.memory_space<vmem>>, vector<256x128xbf16>
    %cst_32 = arith.constant dense<0.000000e+00> : vector<32x128xf32>
    %47 = tpu.matmul %45, %46, %cst_32 {dimension_numbers = #tpu.dot_dimension_numbers<[1], [0], [0], [1], [0, 0, 1, 1], [], []>} : vector<32x256xbf16>, vector<256x128xbf16>, vector<32x128xf32> -> vector<32x128xf32>
    %c0_33 = arith.constant 0 : index
    %c0_34 = arith.constant 0 : index
    %48 = vector.load %arg13[%c0_33, %c0_34] : memref<1x128xf32, #tpu.memory_space<vmem>>, vector<1x128xf32>
    %49 = vector.broadcast %48 : vector<1x128xf32> to vector<32x128xf32>
    %50 = arith.addf %47, %49 : vector<32x128xf32>
    %cst_35 = arith.constant 0.000000e+00 : f32
    %51 = vector.broadcast %cst_35 : f32 to vector<32x128xf32>
    %52 = arith.maximumf %50, %51 : vector<32x128xf32>
    %53 = arith.truncf %52 : vector<32x128xf32> to vector<32x128xbf16>
    %c0_36 = arith.constant 0 : index
    %c0_37 = arith.constant 0 : index
    %54 = vector.load %arg14[%c0_36, %c0_37] : memref<128x6xbf16, #tpu.memory_space<vmem>>, vector<128x6xbf16>
    %cst_38 = arith.constant dense<0.000000e+00> : vector<32x6xf32>
    %55 = tpu.matmul %53, %54, %cst_38 {dimension_numbers = #tpu.dot_dimension_numbers<[1], [0], [0], [1], [0, 0, 1, 1], [], []>} : vector<32x128xbf16>, vector<128x6xbf16>, vector<32x6xf32> -> vector<32x6xf32>
    %c0_39 = arith.constant 0 : index
    %c0_40 = arith.constant 0 : index
    %56 = vector.load %arg15[%c0_39, %c0_40] : memref<1x6xf32, #tpu.memory_space<vmem>>, vector<1x6xf32>
    %57 = vector.broadcast %56 : vector<1x6xf32> to vector<32x6xf32>
    %58 = arith.addf %55, %57 : vector<32x6xf32>
    %59 = vector.shape_cast %58 : vector<32x6xf32> to vector<2x16x6xf32>
    %cst_41 = arith.constant dense<0xFF800000> : vector<2x16xf32>
    %60 = vector.multi_reduction <maximumf>, %59, %cst_41 [2] : vector<2x16x6xf32> to vector<2x16xf32>
    %61 = vector.shape_cast %60 : vector<2x16xf32> to vector<2x16x1xf32>
    %62 = vector.broadcast %61 : vector<2x16x1xf32> to vector<2x16x6xf32>
    %63 = arith.subf %59, %62 : vector<2x16x6xf32>
    %64 = math.exp %63 : vector<2x16x6xf32>
    %cst_42 = arith.constant dense<0.000000e+00> : vector<2x16xf32>
    %65 = vector.multi_reduction <add>, %64, %cst_42 [2] : vector<2x16x6xf32> to vector<2x16xf32>
    %66 = vector.shape_cast %65 : vector<2x16xf32> to vector<2x16x1xf32>
    %67 = math.log %66 : vector<2x16x1xf32>
    %68 = vector.broadcast %67 : vector<2x16x1xf32> to vector<2x16x6xf32>
    %69 = arith.subf %63, %68 : vector<2x16x6xf32>
    %c0_43 = arith.constant 0 : index
    %c0_44 = arith.constant 0 : index
    %c0_45 = arith.constant 0 : index
    %70 = vector.load %arg18[%c0_43, %c0_44, %c0_45] : memref<2x16x6xf32, #tpu.memory_space<vmem>>, vector<2x16x6xf32>
    tpu.vector_store %arg18[%c0_43, %c0_44, %c0_45], %69 {strides = array<i32>} : memref<2x16x6xf32, #tpu.memory_space<vmem>>, vector<2x16x6xf32>,
    %cst_46 = arith.constant dense<0xFF800000> : vector<2x1xf32>
    %71 = vector.multi_reduction <maximumf>, %34, %cst_46 [1] : vector<2x16x1xf32> to vector<2x1xf32>
    %72 = vector.shape_cast %71 : vector<2x1xf32> to vector<2x1x1xf32>
    %73 = vector.broadcast %72 : vector<2x1x1xf32> to vector<2x16x1xf32>
    %74 = arith.subf %34, %73 : vector<2x16x1xf32>
    %75 = math.exp %74 : vector<2x16x1xf32>
    %cst_47 = arith.constant dense<0.000000e+00> : vector<2x1xf32>
    %76 = vector.multi_reduction <add>, %75, %cst_47 [1] : vector<2x16x1xf32> to vector<2x1xf32>
    %77 = vector.shape_cast %76 : vector<2x1xf32> to vector<2x1x1xf32>
    %78 = math.log %77 : vector<2x1x1xf32>
    %79 = vector.broadcast %78 : vector<2x1x1xf32> to vector<2x16x1xf32>
    %80 = arith.subf %74, %79 : vector<2x16x1xf32>
    %81 = math.exp %80 : vector<2x16x1xf32>
    %82 = vector.broadcast %81 : vector<2x16x1xf32> to vector<2x16x6xf32>
    %83 = arith.mulf %82, %59 : vector<2x16x6xf32>
    %cst_48 = arith.constant dense<0.000000e+00> : vector<2x6xf32>
    %84 = vector.multi_reduction <add>, %83, %cst_48 [1] : vector<2x16x6xf32> to vector<2x6xf32>
    %cst_49 = arith.constant dense<0xFF800000> : vector<2xf32>
    %85 = vector.multi_reduction <maximumf>, %84, %cst_49 [1] : vector<2x6xf32> to vector<2xf32>
    %86 = vector.shape_cast %85 : vector<2xf32> to vector<2x1xf32>
    %87 = vector.broadcast %86 : vector<2x1xf32> to vector<2x6xf32>
    %88 = arith.subf %84, %87 : vector<2x6xf32>
    %89 = math.exp %88 : vector<2x6xf32>
    %cst_50 = arith.constant dense<0.000000e+00> : vector<2xf32>
    %90 = vector.multi_reduction <add>, %89, %cst_50 [1] : vector<2x6xf32> to vector<2xf32>
    %91 = vector.shape_cast %90 : vector<2xf32> to vector<2x1xf32>
    %92 = math.log %91 : vector<2x1xf32>
    %93 = vector.broadcast %92 : vector<2x1xf32> to vector<2x6xf32>
    %94 = arith.subf %88, %93 : vector<2x6xf32>
    %c0_51 = arith.constant 0 : index
    %c0_52 = arith.constant 0 : index
    %95 = vector.load %arg16[%c0_51, %c0_52] : memref<2x6xf32, #tpu.memory_space<vmem>>, vector<2x6xf32>
    tpu.vector_store %arg16[%c0_51, %c0_52], %94 {strides = array<i32>} : memref<2x6xf32, #tpu.memory_space<vmem>>, vector<2x6xf32>,
    %96 = arith.mulf %81, %80 : vector<2x16x1xf32>
    %cst_53 = arith.constant dense<0.000000e+00> : vector<2x1xf32>
    %97 = vector.multi_reduction <add>, %96, %cst_53 [1] : vector<2x16x1xf32> to vector<2x1xf32>
    %c0_54 = arith.constant 0 : index
    %c0_55 = arith.constant 0 : index
    %98 = vector.load %arg17[%c0_54, %c0_55] : memref<2x1xf32, #tpu.memory_space<vmem>>, vector<2x1xf32>
    tpu.vector_store %arg17[%c0_54, %c0_55], %97 {strides = array<i32>} : memref<2x1xf32, #tpu.memory_space<vmem>>, vector<2x1xf32>,
    return
  }
  func.func @transform_0(%arg0: i32) -> (i32, i32) {
    %c0_i32 = arith.constant 0 : i32
    %c0_i32_0 = arith.constant 0 : i32
    return %arg0, %c0_i32 : i32, i32
  }
  func.func @transform_1(%arg0: i32) -> (i32, i32) {
    %c0_i32 = arith.constant 0 : i32
    %c0_i32_0 = arith.constant 0 : i32
    return %arg0, %c0_i32 : i32, i32
  }
  func.func @transform_2(%arg0: i32) -> (i32, i32) {
    %c0_i32 = arith.constant 0 : i32
    %c0_i32_0 = arith.constant 0 : i32
    %c0_i32_1 = arith.constant 0 : i32
    return %c0_i32, %c0_i32_0 : i32, i32
  }
  func.func @transform_3(%arg0: i32) -> (i32, i32) {
    %c0_i32 = arith.constant 0 : i32
    %c0_i32_0 = arith.constant 0 : i32
    %c0_i32_1 = arith.constant 0 : i32
    return %c0_i32, %c0_i32_0 : i32, i32
  }
  func.func @transform_4(%arg0: i32) -> (i32, i32) {
    %c0_i32 = arith.constant 0 : i32
    %c0_i32_0 = arith.constant 0 : i32
    %c0_i32_1 = arith.constant 0 : i32
    return %c0_i32, %c0_i32_0 : i32, i32
  }
  func.func @transform_5(%arg0: i32) -> (i32, i32) {
    %c0_i32 = arith.constant 0 : i32
    %c0_i32_0 = arith.constant 0 : i32
    %c0_i32_1 = arith.constant 0 : i32
    return %c0_i32, %c0_i32_0 : i32, i32
  }
  func.func @transform_6(%arg0: i32) -> (i32, i32) {
    %c0_i32 = arith.constant 0 : i32
    %c0_i32_0 = arith.constant 0 : i32
    %c0_i32_1 = arith.constant 0 : i32
    return %c0_i32, %c0_i32_0 : i32, i32
  }
  func.func @transform_7(%arg0: i32) -> (i32, i32) {
    %c0_i32 = arith.constant 0 : i32
    %c0_i32_0 = arith.constant 0 : i32
    %c0_i32_1 = arith.constant 0 : i32
    return %c0_i32, %c0_i32_0 : i32, i32
  }
  func.func @transform_8(%arg0: i32) -> (i32, i32) {
    %c0_i32 = arith.constant 0 : i32
    %c0_i32_0 = arith.constant 0 : i32
    %c0_i32_1 = arith.constant 0 : i32
    return %c0_i32, %c0_i32_0 : i32, i32
  }
  func.func @transform_9(%arg0: i32) -> (i32, i32) {
    %c0_i32 = arith.constant 0 : i32
    %c0_i32_0 = arith.constant 0 : i32
    %c0_i32_1 = arith.constant 0 : i32
    return %c0_i32, %c0_i32_0 : i32, i32
  }
  func.func @transform_10(%arg0: i32) -> (i32, i32) {
    %c0_i32 = arith.constant 0 : i32
    %c0_i32_0 = arith.constant 0 : i32
    %c0_i32_1 = arith.constant 0 : i32
    return %c0_i32, %c0_i32_0 : i32, i32
  }
  func.func @transform_11(%arg0: i32) -> (i32, i32) {
    %c0_i32 = arith.constant 0 : i32
    %c0_i32_0 = arith.constant 0 : i32
    %c0_i32_1 = arith.constant 0 : i32
    return %c0_i32, %c0_i32_0 : i32, i32
  }
  func.func @transform_12(%arg0: i32) -> (i32, i32) {
    %c0_i32 = arith.constant 0 : i32
    %c0_i32_0 = arith.constant 0 : i32
    %c0_i32_1 = arith.constant 0 : i32
    return %c0_i32, %c0_i32_0 : i32, i32
  }
  func.func @transform_13(%arg0: i32) -> (i32, i32) {
    %c0_i32 = arith.constant 0 : i32
    %c0_i32_0 = arith.constant 0 : i32
    %c0_i32_1 = arith.constant 0 : i32
    return %c0_i32, %c0_i32_0 : i32, i32
  }
  func.func @transform_14(%arg0: i32) -> (i32, i32) {
    %c0_i32 = arith.constant 0 : i32
    %c0_i32_0 = arith.constant 0 : i32
    %c0_i32_1 = arith.constant 0 : i32
    return %c0_i32, %c0_i32_0 : i32, i32
  }
  func.func @transform_15(%arg0: i32) -> (i32, i32) {
    %c0_i32 = arith.constant 0 : i32
    %c0_i32_0 = arith.constant 0 : i32
    return %arg0, %c0_i32 : i32, i32
  }
  func.func @transform_16(%arg0: i32) -> (i32, i32) {
    %c0_i32 = arith.constant 0 : i32
    %c0_i32_0 = arith.constant 0 : i32
    return %arg0, %c0_i32 : i32, i32
  }
  func.func @transform_17(%arg0: i32) -> (i32, i32, i32) {
    %c0_i32 = arith.constant 0 : i32
    %c0_i32_0 = arith.constant 0 : i32
    %c0_i32_1 = arith.constant 0 : i32
    return %arg0, %c0_i32, %c0_i32_0 : i32, i32, i32
  }
}

</mosaic_0001>

<llo_original>
// kernel: tpu_custom_call.1
$region0: #{tpu_custom_call.1}
  #allocation0 [shape = 'u32[]', space=smem, size = 0x4, offset = 0x4, fixed_abs, tag = 'smem constant byte address 0x4 - core index']
  #allocation1 [shape = 'u32[144,128]{1,0:T(1,128)}', space=vmem, size = 0x12000, scoped, tag = 'internal scratch']
  #allocation2 [shape = 'f32[1,1]{1,0:T(1,128)S(1)}', space=vmem, size = 0x200, scoped, tag = 'scoped memory for tpu_custom_call.1']
  %s0 = inlined_call_operand.hbm [shape: f32[32,441], index: 0, kind: input, shape index: {}]
  %s1 = inlined_call_operand.hbm [shape: f32[32,441], index: 1, kind: input, shape index: {}]
  %s2 = inlined_call_operand.vmem [shape: bf16[441,64], index: 2, kind: input, shape index: {}]
  %s3 = inlined_call_operand.hbm [shape: f32[1,64], index: 3, kind: input, shape index: {}]
  %s4 = inlined_call_operand.hbm [shape: bf16[64,64], index: 4, kind: input, shape index: {}]
  %s5 = inlined_call_operand.hbm [shape: f32[1,64], index: 5, kind: input, shape index: {}]
  %s6 = inlined_call_operand.hbm [shape: f32[1,64], index: 6, kind: input, shape index: {}]
  %s7 = inlined_call_operand.<no memory space> [shape: f32[1,1], index: 7, kind: input, shape index: {}]
  %s8 = inlined_call_operand.vmem [shape: bf16[441,256], index: 8, kind: input, shape index: {}]
  %s9 = inlined_call_operand.hbm [shape: bf16[441,256], index: 9, kind: input, shape index: {}]
  %s10 = inlined_call_operand.vmem [shape: f32[1,256], index: 10, kind: input, shape index: {}]
  %s11 = inlined_call_operand.hbm [shape: bf16[256,128], index: 11, kind: input, shape index: {}]
  %s12 = inlined_call_operand.vmem [shape: f32[1,128], index: 12, kind: input, shape index: {}]
  %s13 = inlined_call_operand.vmem [shape: bf16[128,6], index: 13, kind: input, shape index: {}]
  %s14 = inlined_call_operand.vmem [shape: f32[1,6], index: 14, kind: input, shape index: {}]
  %s15 = inlined_call_operand.hbm [shape: f32[2,6], index: 15, kind: output, shape index: {0}]
  %s16 = inlined_call_operand.vmem [shape: f32[2,1], index: 16, kind: output, shape index: {1}]
  %s17 = inlined_call_operand.vmem [shape: f32[2,16,6], index: 17, kind: output, shape index: {2}]
  %18 = xla_tuple %s15, %s16, %s17
  %s19 = sld [smem:[#allocation0]]
  $region118: #{tpu_custom_call.1} parent=0
    _
  %s21 = ssub.s32 1, %s19
  %s22 = scalar_select 0, %s21, %s19
  %v23 = vstv %s7
  %24 = vst [vmem:[#allocation2] sm:$0x1] %v23
  $region1: #{tpu_custom_call.1} parent=0
    #allocation3 [shape = 'u8[65536]{0}', space=vmem, size = 0x10000, scoped, tag = 'input window, operand 0, single buffered']
    #allocation4 [shape = 's32[1]{0}', space=sflag, size = 0x4, scoped, tag = 'scoped memory for tpu_custom_call.1']
    #allocation5 [shape = 's32[1]{0}', space=sflag, size = 0x4, scoped, tag = 'scoped memory for tpu_custom_call.1']
    #allocation6 [shape = 'u8[65536]{0}', space=vmem, size = 0x10000, scoped, tag = 'input window, operand 1, single buffered']
    #allocation7 [shape = 's32[1]{0}', space=sflag, size = 0x4, scoped, tag = 'scoped memory for tpu_custom_call.1']
    #allocation8 [shape = 'u8[512]{0}', space=vmem, size = 0x400, scoped, tag = 'input window, operand 3, single buffered']
    #allocation9 [shape = 'u8[16384]{0}', space=vmem, size = 0x4000, scoped, tag = 'input window, operand 4, single buffered']
    #allocation10 [shape = 's32[1]{0}', space=sflag, size = 0x4, scoped, tag = 'scoped memory for tpu_custom_call.1']
    #allocation11 [shape = 'u8[512]{0}', space=vmem, size = 0x400, scoped, tag = 'input window, operand 5, single buffered']
    #allocation12 [shape = 'u8[512]{0}', space=vmem, size = 0x400, scoped, tag = 'input window, operand 6, single buffered']
    #allocation13 [shape = 's32[1]{0}', space=sflag, size = 0x4, scoped, tag = 'scoped memory for tpu_custom_call.1']
    #allocation14 [shape = 'u8[229376]{0}', space=vmem, size = 0x38000, scoped, tag = 'input window, operand 9, single buffered']
    #allocation15 [shape = 'u8[65536]{0}', space=vmem, size = 0x10000, scoped, tag = 'input window, operand 11, single buffered']
    #allocation16 [shape = 's32[1]{0}', space=sflag, size = 0x4, scoped, tag = 'scoped memory for tpu_custom_call.1']
    #allocation17 [shape = 'u8[1024]{0}', space=vmem, size = 0x400, scoped, tag = 'output window, operand 0, single buffered']
    %25 = vsyncpa [#allocation4], 0
    %26 = vsyncpa [#allocation7], 0
    %27 = vsyncpa [#allocation10], 0
    %28 = vsyncpa [#allocation13], 0
    %29 = vsyncpa [#allocation16], 0
    %30 = vsyncpa [#allocation5], 0
    // Predicated region
    $region2: #{tpu_custom_call.1} parent=1 // pred_check
      _
    $region3: #{tpu_custom_call.1} parent=1 // pred_check_branch
      %32 = sbr.rel (0) target = $region5
    $region4: #{tpu_custom_call.1} parent=1 // pred_region
      %s34 = ssub.s32 2048, 2048
      %35 = vsyncadd [#allocation4], %s34
      %s36 = sshll.u32 [#allocation3], 4
      %s37 = int_to_ptr.vmem [resolvable:$true] %s36
      %42 = dma.hbm_to_vmem [thread:$0]  %s0, 2048, %s37, [#allocation4], 512, 512, 32
    $region5: #{tpu_custom_call.1} parent=1 // pred_fallthru
      _
    // Predicated region
    $region6: #{tpu_custom_call.1} parent=1 // pred_check
      _
    $region7: #{tpu_custom_call.1} parent=1 // pred_check_branch
      %44 = sbr.rel (0) target = $region9
    $region8: #{tpu_custom_call.1} parent=1 // pred_region
      %s46 = ssub.s32 2048, 2048
      %47 = vsyncadd [#allocation7], %s46
      %s48 = sshll.u32 [#allocation6], 4
      %s49 = int_to_ptr.vmem [resolvable:$true] %s48
      %54 = dma.hbm_to_vmem [thread:$0]  %s1, 2048, %s49, [#allocation7], 512, 512, 32
    $region9: #{tpu_custom_call.1} parent=1 // pred_fallthru
      _
    // Predicated region
    $region10: #{tpu_custom_call.1} parent=1 // pred_check
      _
    $region11: #{tpu_custom_call.1} parent=1 // pred_check_branch
      %56 = sbr.rel (0) target = $region13
    $region12: #{tpu_custom_call.1} parent=1 // pred_region
      _
    $region13: #{tpu_custom_call.1} parent=1 // pred_fallthru
      _
    // Predicated region
    $region14: #{tpu_custom_call.1} parent=1 // pred_check
      _
    $region15: #{tpu_custom_call.1} parent=1 // pred_check_branch
      %58 = sbr.rel (0) target = $region17
    $region16: #{tpu_custom_call.1} parent=1 // pred_region
      %s60 = ssub.s32 16, 16
      %61 = vsyncadd [#allocation7], %s60
      %s63 = sshll.u32 [#allocation8], 4
      %s64 = int_to_ptr.vmem [resolvable:$true] %s63
      %66 = dma.hbm_to_vmem [thread:$0]  %s3, 16, %s64, [#allocation7]
    $region17: #{tpu_custom_call.1} parent=1 // pred_fallthru
      _
    // Predicated region
    $region18: #{tpu_custom_call.1} parent=1 // pred_check
      _
    $region19: #{tpu_custom_call.1} parent=1 // pred_check_branch
      %68 = sbr.rel (0) target = $region21
    $region20: #{tpu_custom_call.1} parent=1 // pred_region
      %s70 = ssub.s32 512, 512
      %71 = vsyncadd [#allocation10], %s70
      %s72 = sshll.u32 [#allocation9], 4
      %s73 = int_to_ptr.vmem [resolvable:$true] %s72
      %78 = dma.hbm_to_vmem [thread:$0]  %s4, 512, %s73, [#allocation10], 64, 64, 4
    $region21: #{tpu_custom_call.1} parent=1 // pred_fallthru
      _
    // Predicated region
    $region22: #{tpu_custom_call.1} parent=1 // pred_check
      _
    $region23: #{tpu_custom_call.1} parent=1 // pred_check_branch
      %80 = sbr.rel (0) target = $region25
    $region24: #{tpu_custom_call.1} parent=1 // pred_region
      %s82 = ssub.s32 16, 16
      %83 = vsyncadd [#allocation10], %s82
      %s85 = sshll.u32 [#allocation11], 4
      %s86 = int_to_ptr.vmem [resolvable:$true] %s85
      %88 = dma.hbm_to_vmem [thread:$0]  %s5, 16, %s86, [#allocation10]
    $region25: #{tpu_custom_call.1} parent=1 // pred_fallthru
      _
    // Predicated region
    $region26: #{tpu_custom_call.1} parent=1 // pred_check
      _
    $region27: #{tpu_custom_call.1} parent=1 // pred_check_branch
      %90 = sbr.rel (0) target = $region29
    $region28: #{tpu_custom_call.1} parent=1 // pred_region
      %s92 = ssub.s32 16, 16
      %93 = vsyncadd [#allocation13], %s92
      %s95 = sshll.u32 [#allocation12], 4
      %s96 = int_to_ptr.vmem [resolvable:$true] %s95
      %98 = dma.hbm_to_vmem [thread:$0]  %s6, 16, %s96, [#allocation13]
    $region29: #{tpu_custom_call.1} parent=1 // pred_fallthru
      _
    // Predicated region
    $region30: #{tpu_custom_call.1} parent=1 // pred_check
      _
    $region31: #{tpu_custom_call.1} parent=1 // pred_check_branch
      %100 = sbr.rel (0) target = $region33
    $region32: #{tpu_custom_call.1} parent=1 // pred_region
      _
    $region33: #{tpu_custom_call.1} parent=1 // pred_fallthru
      _
    // Predicated region
    $region34: #{tpu_custom_call.1} parent=1 // pred_check
      _
    $region35: #{tpu_custom_call.1} parent=1 // pred_check_branch
      %102 = sbr.rel (0) target = $region37
    $region36: #{tpu_custom_call.1} parent=1 // pred_region
      _
    $region37: #{tpu_custom_call.1} parent=1 // pred_fallthru
      _
    // Predicated region
    $region38: #{tpu_custom_call.1} parent=1 // pred_check
      _
    $region39: #{tpu_custom_call.1} parent=1 // pred_check_branch
      %104 = sbr.rel (0) target = $region41
    $region40: #{tpu_custom_call.1} parent=1 // pred_region
      %s106 = ssub.s32 7168, 7168
      %107 = vsyncadd [#allocation13], %s106
      %s108 = sshll.u32 [#allocation14], 4
      %s109 = int_to_ptr.vmem [resolvable:$true] %s108
      %114 = dma.hbm_to_vmem [thread:$0]  %s9, 7168, %s109, [#allocation13], 128, 128, 8
    $region41: #{tpu_custom_call.1} parent=1 // pred_fallthru
      _
    // Predicated region
    $region42: #{tpu_custom_call.1} parent=1 // pred_check
      _
    $region43: #{tpu_custom_call.1} parent=1 // pred_check_branch
      %116 = sbr.rel (0) target = $region45
    $region44: #{tpu_custom_call.1} parent=1 // pred_region
      _
    $region45: #{tpu_custom_call.1} parent=1 // pred_fallthru
      _
    // Predicated region
    $region46: #{tpu_custom_call.1} parent=1 // pred_check
      _
    $region47: #{tpu_custom_call.1} parent=1 // pred_check_branch
      %118 = sbr.rel (0) target = $region49
    $region48: #{tpu_custom_call.1} parent=1 // pred_region
      %s120 = ssub.s32 2048, 2048
      %121 = vsyncadd [#allocation16], %s120
      %s122 = sshll.u32 [#allocation15], 4
      %s123 = int_to_ptr.vmem [resolvable:$true] %s122
      %128 = dma.hbm_to_vmem [thread:$0]  %s11, 2048, %s123, [#allocation16], 64, 64, 4
    $region49: #{tpu_custom_call.1} parent=1 // pred_fallthru
      _
    // Predicated region
    $region50: #{tpu_custom_call.1} parent=1 // pred_check
      _
    $region51: #{tpu_custom_call.1} parent=1 // pred_check_branch
      %130 = sbr.rel (0) target = $region53
    $region52: #{tpu_custom_call.1} parent=1 // pred_region
      _
    $region53: #{tpu_custom_call.1} parent=1 // pred_fallthru
      _
    // Predicated region
    $region54: #{tpu_custom_call.1} parent=1 // pred_check
      _
    $region55: #{tpu_custom_call.1} parent=1 // pred_check_branch
      %132 = sbr.rel (0) target = $region57
    $region56: #{tpu_custom_call.1} parent=1 // pred_region
      _
    $region57: #{tpu_custom_call.1} parent=1 // pred_fallthru
      _
    // Predicated region
    $region58: #{tpu_custom_call.1} parent=1 // pred_check
      _
    $region59: #{tpu_custom_call.1} parent=1 // pred_check_branch
      %134 = sbr.rel (0) target = $region61
    $region60: #{tpu_custom_call.1} parent=1 // pred_region
      _
    $region61: #{tpu_custom_call.1} parent=1 // pred_fallthru
      _
    // Predicated region
    $region62: #{tpu_custom_call.1} parent=1 // pred_check
      _
    $region63: #{tpu_custom_call.1} parent=1 // pred_check_branch
      %136 = sbr.rel (0) target = $region65
    $region64: #{tpu_custom_call.1} parent=1 // pred_region
      %137 = dma.done [#allocation4], 2048
    $region65: #{tpu_custom_call.1} parent=1 // pred_fallthru
      _
    // Predicated region
    $region66: #{tpu_custom_call.1} parent=1 // pred_check
      _
    $region67: #{tpu_custom_call.1} parent=1 // pred_check_branch
      %139 = sbr.rel (0) target = $region69
    $region68: #{tpu_custom_call.1} parent=1 // pred_region
      %140 = dma.done [#allocation7], 2048
    $region69: #{tpu_custom_call.1} parent=1 // pred_fallthru
      _
    // Predicated region
    $region70: #{tpu_custom_call.1} parent=1 // pred_check
      _
    $region71: #{tpu_custom_call.1} parent=1 // pred_check_branch
      %142 = sbr.rel (0) target = $region73
    $region72: #{tpu_custom_call.1} parent=1 // pred_region
      %143 = dma.done [#allocation7], 16
    $region73: #{tpu_custom_call.1} parent=1 // pred_fallthru
      _
    // Predicated region
    $region74: #{tpu_custom_call.1} parent=1 // pred_check
      _
    $region75: #{tpu_custom_call.1} parent=1 // pred_check_branch
      %145 = sbr.rel (0) target = $region77
    $region76: #{tpu_custom_call.1} parent=1 // pred_region
      %146 = dma.done [#allocation10], 512
    $region77: #{tpu_custom_call.1} parent=1 // pred_fallthru
      _
    // Predicated region
    $region78: #{tpu_custom_call.1} parent=1 // pred_check
      _
    $region79: #{tpu_custom_call.1} parent=1 // pred_check_branch
      %148 = sbr.rel (0) target = $region81
    $region80: #{tpu_custom_call.1} parent=1 // pred_region
      %149 = dma.done [#allocation10], 16
    $region81: #{tpu_custom_call.1} parent=1 // pred_fallthru
      _
    // Predicated region
    $region82: #{tpu_custom_call.1} parent=1 // pred_check
      _
    $region83: #{tpu_custom_call.1} parent=1 // pred_check_branch
      %151 = sbr.rel (0) target = $region85
    $region84: #{tpu_custom_call.1} parent=1 // pred_region
      %152 = dma.done [#allocation13], 16
    $region85: #{tpu_custom_call.1} parent=1 // pred_fallthru
      _
    // Predicated region
    $region86: #{tpu_custom_call.1} parent=1 // pred_check
      _
    $region87: #{tpu_custom_call.1} parent=1 // pred_check_branch
      %154 = sbr.rel (0) target = $region89
    $region88: #{tpu_custom_call.1} parent=1 // pred_region
      %155 = dma.done [#allocation13], 7168
    $region89: #{tpu_custom_call.1} parent=1 // pred_fallthru
      _
    // Predicated region
    $region90: #{tpu_custom_call.1} parent=1 // pred_check
      _
    $region91: #{tpu_custom_call.1} parent=1 // pred_check_branch
      %157 = sbr.rel (0) target = $region93
    $region92: #{tpu_custom_call.1} parent=1 // pred_region
      %158 = dma.done [#allocation16], 2048
    $region93: #{tpu_custom_call.1} parent=1 // pred_fallthru
      _
    %v160 = vld [vmem:[#allocation3] sm:$0xff]
    %v161 = vld [vmem:[#allocation3 + $0x8] sm:$0xff]
    %v162 = vld [vmem:[#allocation3 + $0x10] sm:$0xff]
    %v163 = vld [vmem:[#allocation3 + $0x18] sm:$0xff]
    %v164 = vld [vmem:[#allocation3 + $0x20] sm:$0xff]
    %v165 = vld [vmem:[#allocation3 + $0x28] sm:$0xff]
    %v166 = vld [vmem:[#allocation3 + $0x30] sm:$0xff]
    %v167 = vld [vmem:[#allocation3 + $0x38] sm:$0xff]
    %v168 = vld [vmem:[#allocation3 + $0x40] sm:$0xff]
    %v169 = vld [vmem:[#allocation3 + $0x48] sm:$0xff]
    %v170 = vld [vmem:[#allocation3 + $0x50] sm:$0xff]
    %v171 = vld [vmem:[#allocation3 + $0x58] sm:$0xff]
    %v172 = vld [vmem:[#allocation3 + $0x60] sm:$0xff]
    %v173 = vld [vmem:[#allocation3 + $0x68] sm:$0xff]
    %v174 = vld [vmem:[#allocation3 + $0x70] sm:$0xff]
    %v175 = vld [vmem:[#allocation3 + $0x78] sm:$0xff]
    %v176 = vmul.f32 %v160, 0.003921569
    %v177 = vmul.f32 %v161, 0.003921569
    %v178 = vmul.f32 %v162, 0.003921569
    %v179 = vmul.f32 %v163, 0.003921569
    %v180 = vmul.f32 %v164, 0.003921569
    %v181 = vmul.f32 %v165, 0.003921569
    %v182 = vmul.f32 %v166, 0.003921569
    %v183 = vmul.f32 %v167, 0.003921569
    %v184 = vmul.f32 %v168, 0.003921569
    %v185 = vmul.f32 %v169, 0.003921569
    %v186 = vmul.f32 %v170, 0.003921569
    %v187 = vmul.f32 %v171, 0.003921569
    %v188 = vmul.f32 %v172, 0.003921569
    %v189 = vmul.f32 %v173, 0.003921569
    %v190 = vmul.f32 %v174, 0.003921569
    %v191 = vmul.f32 %v175, 0.003921569
    %v192 = vld [vmem:[#allocation6] sm:$0xff]
    %v193 = vld [vmem:[#allocation6 + $0x8] sm:$0xff]
    %v194 = vld [vmem:[#allocation6 + $0x10] sm:$0xff]
    %v195 = vld [vmem:[#allocation6 + $0x18] sm:$0xff]
    %v196 = vld [vmem:[#allocation6 + $0x20] sm:$0xff]
    %v197 = vld [vmem:[#allocation6 + $0x28] sm:$0xff]
    %v198 = vld [vmem:[#allocation6 + $0x30] sm:$0xff]
    %v199 = vld [vmem:[#allocation6 + $0x38] sm:$0xff]
    %v200 = vld [vmem:[#allocation6 + $0x40] sm:$0xff]
    %v201 = vld [vmem:[#allocation6 + $0x48] sm:$0xff]
    %v202 = vld [vmem:[#allocation6 + $0x50] sm:$0xff]
    %v203 = vld [vmem:[#allocation6 + $0x58] sm:$0xff]
    %v204 = vld [vmem:[#allocation6 + $0x60] sm:$0xff]
    %v205 = vld [vmem:[#allocation6 + $0x68] sm:$0xff]
    %v206 = vld [vmem:[#allocation6 + $0x70] sm:$0xff]
    %v207 = vld [vmem:[#allocation6 + $0x78] sm:$0xff]
    %v208 = vmul.f32 %v192, 0.003921569
    %v209 = vmul.f32 %v193, 0.003921569
    %v210 = vmul.f32 %v194, 0.003921569
    %v211 = vmul.f32 %v195, 0.003921569
    %v212 = vmul.f32 %v196, 0.003921569
    %v213 = vmul.f32 %v197, 0.003921569
    %v214 = vmul.f32 %v198, 0.003921569
    %v215 = vmul.f32 %v199, 0.003921569
    %v216 = vmul.f32 %v200, 0.003921569
    %v217 = vmul.f32 %v201, 0.003921569
    %v218 = vmul.f32 %v202, 0.003921569
    %v219 = vmul.f32 %v203, 0.003921569
    %v220 = vmul.f32 %v204, 0.003921569
    %v221 = vmul.f32 %v205, 0.003921569
    %v222 = vmul.f32 %v206, 0.003921569
    %v223 = vmul.f32 %v207, 0.003921569
    %v224 = vsub.f32 %v176, %v208
    %v225 = vsub.f32 %v177, %v209
    %v226 = vsub.f32 %v178, %v210
    %v227 = vsub.f32 %v179, %v211
    %v228 = vsub.f32 %v180, %v212
    %v229 = vsub.f32 %v181, %v213
    %v230 = vsub.f32 %v182, %v214
    %v231 = vsub.f32 %v183, %v215
    %v232 = vsub.f32 %v184, %v216
    %v233 = vsub.f32 %v185, %v217
    %v234 = vsub.f32 %v186, %v218
    %v235 = vsub.f32 %v187, %v219
    %v236 = vsub.f32 %v188, %v220
    %v237 = vsub.f32 %v189, %v221
    %v238 = vsub.f32 %v190, %v222
    %v239 = vsub.f32 %v191, %v223
    %v240 = vpack.c.bf16 %v180, %v176
    %v241 = vpack.c.bf16 %v181, %v177
    %v242 = vpack.c.bf16 %v182, %v178
    %v243 = vpack.c.bf16 %v183, %v179
    %v244 = vpack.c.bf16 %v188, %v184
    %v245 = vpack.c.bf16 %v189, %v185
    %v246 = vpack.c.bf16 %v190, %v186
    %v247 = vpack.c.bf16 %v191, %v187
    %v248 = vpack.c.bf16 %v228, %v224
    %v249 = vpack.c.bf16 %v229, %v225
    %v250 = vpack.c.bf16 %v230, %v226
    %v251 = vpack.c.bf16 %v231, %v227
    %v252 = vpack.c.bf16 %v236, %v232
    %v253 = vpack.c.bf16 %v237, %v233
    %v254 = vpack.c.bf16 %v238, %v234
    %v255 = vpack.c.bf16 %v239, %v235
    %v256 = vld [vmem:[%s2] sm:$0xf]
    %v257 = vld [vmem:[%s2 + $0x4] sm:$0xf]
    %v258 = vld [vmem:[%s2 + $0x8] sm:$0xf]
    %v259 = vld [vmem:[%s2 + $0xc] sm:$0xf]
    %v260 = vld [vmem:[%s2 + $0x10] sm:$0xf]
    %v261 = vld [vmem:[%s2 + $0x14] sm:$0xf]
    %v262 = vld [vmem:[%s2 + $0x18] sm:$0xf]
    %v263 = vld [vmem:[%s2 + $0x1c] sm:$0xf]
    %v264 = vld [vmem:[%s2 + $0x20] sm:$0xf]
    %v265 = vld [vmem:[%s2 + $0x24] sm:$0xf]
    %v266 = vld [vmem:[%s2 + $0x28] sm:$0xf]
    %v267 = vld [vmem:[%s2 + $0x2c] sm:$0xf]
    %v268 = vld [vmem:[%s2 + $0x30] sm:$0xf]
    %v269 = vld [vmem:[%s2 + $0x34] sm:$0xf]
    %v270 = vld [vmem:[%s2 + $0x38] sm:$0xf]
    %v271 = vld [vmem:[%s2 + $0x3c] sm:$0xf]
    %v272 = vld [vmem:[%s2 + $0x40] sm:$0xf]
    %v273 = vld [vmem:[%s2 + $0x44] sm:$0xf]
    %v274 = vld [vmem:[%s2 + $0x48] sm:$0xf]
    %v275 = vld [vmem:[%s2 + $0x4c] sm:$0xf]
    %v276 = vld [vmem:[%s2 + $0x50] sm:$0xf]
    %v277 = vld [vmem:[%s2 + $0x54] sm:$0xf]
    %v278 = vld [vmem:[%s2 + $0x58] sm:$0xf]
    %v279 = vld [vmem:[%s2 + $0x5c] sm:$0xf]
    %v280 = vld [vmem:[%s2 + $0x60] sm:$0xf]
    %v281 = vld [vmem:[%s2 + $0x64] sm:$0xf]
    %v282 = vld [vmem:[%s2 + $0x68] sm:$0xf]
    %v283 = vld [vmem:[%s2 + $0x6c] sm:$0xf]
    %v284 = vld [vmem:[%s2 + $0x70] sm:$0xf]
    %v285 = vld [vmem:[%s2 + $0x74] sm:$0xf]
    %v286 = vld [vmem:[%s2 + $0x78] sm:$0xf]
    %v287 = vld [vmem:[%s2 + $0x7c] sm:$0xf]
    %v288 = vld [vmem:[%s2 + $0x80] sm:$0xf]
    %v289 = vld [vmem:[%s2 + $0x84] sm:$0xf]
    %v290 = vld [vmem:[%s2 + $0x88] sm:$0xf]
    %v291 = vld [vmem:[%s2 + $0x8c] sm:$0xf]
    %v292 = vld [vmem:[%s2 + $0x90] sm:$0xf]
    %v293 = vld [vmem:[%s2 + $0x94] sm:$0xf]
    %v294 = vld [vmem:[%s2 + $0x98] sm:$0xf]
    %v295 = vld [vmem:[%s2 + $0x9c] sm:$0xf]
    %v296 = vld [vmem:[%s2 + $0xa0] sm:$0xf]
    %v297 = vld [vmem:[%s2 + $0xa4] sm:$0xf]
    %v298 = vld [vmem:[%s2 + $0xa8] sm:$0xf]
    %v299 = vld [vmem:[%s2 + $0xac] sm:$0xf]
    %v300 = vld [vmem:[%s2 + $0xb0] sm:$0xf]
    %v301 = vld [vmem:[%s2 + $0xb4] sm:$0xf]
    %v302 = vld [vmem:[%s2 + $0xb8] sm:$0xf]
    %v303 = vld [vmem:[%s2 + $0xbc] sm:$0xf]
    %v304 = vld [vmem:[%s2 + $0xc0] sm:$0xf]
    %v305 = vld [vmem:[%s2 + $0xc4] sm:$0xf]
    %v306 = vld [vmem:[%s2 + $0xc8] sm:$0xf]
    %v307 = vld [vmem:[%s2 + $0xcc] sm:$0xf]
    %v308 = vld [vmem:[%s2 + $0xd0] sm:$0xf]
    %v309 = vld [vmem:[%s2 + $0xd4] sm:$0xf]
    %v310 = vld [vmem:[%s2 + $0xd8] sm:$0xf]
    %v311 = vld [vmem:[%s2 + $0xdc] sm:$0x1]
    %v312 = vld [vmem:[#allocation8] sm:$0x1]
    %v314 = vlaneseq
    %v315 = vshrl.u32 %v314, 7
    %v316 = vsub.s32 0, %v315
    %v317 = vrot.slane %v312, %v316
    %v375 = vunpack.c.l.b16 %v256
    %v376 = vunpack.c.l.b16 %v257
    %v377 = vunpack.c.l.b16 %v258
    %v378 = vunpack.c.l.b16 %v259
    %v379 = vunpack.c.l.b16 %v260
    %v380 = vunpack.c.l.b16 %v261
    %v381 = vunpack.c.l.b16 %v262
    %v382 = vunpack.c.l.b16 %v263
    %v383 = vunpack.c.l.b16 %v264
    %v384 = vunpack.c.l.b16 %v265
    %v385 = vunpack.c.l.b16 %v266
    %v386 = vunpack.c.l.b16 %v267
    %v387 = vunpack.c.l.b16 %v268
    %v388 = vunpack.c.l.b16 %v269
    %v389 = vunpack.c.l.b16 %v270
    %v390 = vunpack.c.l.b16 %v271
    %v391 = vunpack.c.l.b16 %v272
    %v392 = vunpack.c.l.b16 %v273
    %v393 = vunpack.c.l.b16 %v274
    %v394 = vunpack.c.l.b16 %v275
    %v395 = vunpack.c.l.b16 %v276
    %v396 = vunpack.c.l.b16 %v277
    %v397 = vunpack.c.l.b16 %v278
    %v398 = vunpack.c.l.b16 %v279
    %v399 = vunpack.c.l.b16 %v280
    %v400 = vunpack.c.l.b16 %v281
    %v401 = vunpack.c.l.b16 %v282
    %v402 = vunpack.c.l.b16 %v283
    %v403 = vunpack.c.l.b16 %v284
    %v404 = vunpack.c.l.b16 %v285
    %v405 = vunpack.c.l.b16 %v286
    %v406 = vunpack.c.l.b16 %v287
    %v407 = vunpack.c.l.b16 %v288
    %v408 = vunpack.c.l.b16 %v289
    %v409 = vunpack.c.l.b16 %v290
    %v410 = vunpack.c.l.b16 %v291
    %v411 = vunpack.c.l.b16 %v292
    %v412 = vunpack.c.l.b16 %v293
    %v413 = vunpack.c.l.b16 %v294
    %v414 = vunpack.c.l.b16 %v295
    %v415 = vunpack.c.l.b16 %v296
    %v416 = vunpack.c.l.b16 %v297
    %v417 = vunpack.c.l.b16 %v298
    %v418 = vunpack.c.l.b16 %v299
    %v419 = vunpack.c.l.b16 %v300
    %v420 = vunpack.c.l.b16 %v301
    %v421 = vunpack.c.l.b16 %v302
    %v422 = vunpack.c.l.b16 %v303
    %v423 = vunpack.c.l.b16 %v304
    %v424 = vunpack.c.l.b16 %v305
    %v425 = vunpack.c.l.b16 %v306
    %v426 = vunpack.c.l.b16 %v307
    %v427 = vunpack.c.l.b16 %v308
    %v428 = vunpack.c.l.b16 %v309
    %v429 = vunpack.c.l.b16 %v310
    %v430 = vunpack.c.l.b16 %v311
    %v431 = vpack.c.b16 %v376, %v375
    %v432 = vpack.c.b16 %v378, %v377
    %v433 = vpack.c.b16 %v380, %v379
    %v434 = vpack.c.b16 %v382, %v381
    %v435 = vpack.c.b16 %v384, %v383
    %v436 = vpack.c.b16 %v386, %v385
    %v437 = vpack.c.b16 %v388, %v387
    %v438 = vpack.c.b16 %v390, %v389
    %v439 = vpack.c.b16 %v392, %v391
    %v440 = vpack.c.b16 %v394, %v393
    %v441 = vpack.c.b16 %v396, %v395
    %v442 = vpack.c.b16 %v398, %v397
    %v443 = vpack.c.b16 %v400, %v399
    %v444 = vpack.c.b16 %v402, %v401
    %v445 = vpack.c.b16 %v404, %v403
    %v446 = vpack.c.b16 %v406, %v405
    %v447 = vpack.c.b16 %v408, %v407
    %v448 = vpack.c.b16 %v410, %v409
    %v449 = vpack.c.b16 %v412, %v411
    %v450 = vpack.c.b16 %v414, %v413
    %v451 = vpack.c.b16 %v416, %v415
    %v452 = vpack.c.b16 %v418, %v417
    %v453 = vpack.c.b16 %v420, %v419
    %v454 = vpack.c.b16 %v422, %v421
    %v455 = vpack.c.b16 %v424, %v423
    %v456 = vpack.c.b16 %v426, %v425
    %v457 = vpack.c.b16 %v428, %v427
    %v458 = vpack.c.b16 %v430, %v429
    %vm486 = vcmask 465920
    %v488 = vsel %vm486, %v243, 0
    %v491 = vsel %vm486, %v247, 0
    %vm493 = vcmask 1043456
    %vm494 = vcmask 1044480
    %v495 = vsel %vm493, 4294967295, 65535
    %v496 = vsel %vm494, %v495, 0
    %v498 = vand.u32 %v458, %v496
    %500 = vmatprep.subr.bf16.mxu0 0
    %501 = vmatpush1.bf16.msra.mxu0 %v431
    %502 = vmatprep.subr.bf16.mxu0 0
    %503 = vmatpush1.bf16.msra.mxu0 %v432
    %504 = vmatprep.subr.bf16.mxu0 0
    %505 = vmatpush1.bf16.msra.mxu0 %v433
    %506 = vmatprep.subr.bf16.mxu0 0
    %507 = vmatpush1.bf16.msra.mxu0 %v434
    %508 = vmatprep.subr.bf16.mxu0 0
    %509 = vmatpush1.bf16.msra.mxu0 %v435
    %510 = vmatprep.subr.bf16.mxu0 0
    %511 = vmatpush1.bf16.msra.mxu0 %v436
    %512 = vmatprep.subr.bf16.mxu0 0
    %513 = vmatpush1.bf16.msra.mxu0 %v437
    %514 = vmatprep.subr.bf16.mxu0 0
    %515 = vmatpush1.bf16.msra.mxu0 %v438
    %516 = vmatprep.subr.bf16.mxu0 0
    %517 = vmatpush1.bf16.msra.mxu0 %v439
    %518 = vmatprep.subr.bf16.mxu0 0
    %519 = vmatpush1.bf16.msra.mxu0 %v440
    %520 = vmatprep.subr.bf16.mxu0 0
    %521 = vmatpush1.bf16.msra.mxu0 %v441
    %522 = vmatprep.subr.bf16.mxu0 0
    %523 = vmatpush1.bf16.msra.mxu0 %v442
    %524 = vmatprep.subr.bf16.mxu0 0
    %525 = vmatpush1.bf16.msra.mxu0 %v443
    %526 = vmatprep.subr.bf16.mxu0 0
    %527 = vmatpush1.bf16.msra.mxu0 %v444
    %528 = vmatprep.subr.bf16.mxu0 0
    %529 = vmatpush1.bf16.msra.mxu0 %v445
    %530 = vmatprep.subr.bf16.mxu0 0
    %531 = vmatpush1.bf16.msra.mxu0 %v446
    %532 = vmatprep.mubr.bf16.mxu0 %v241
    %533 = vmatmul.mubr.bf16.gmra.mrb[0].mxu0 %v240
    %v534 = vpop.f32.mrb[0].mxu0
    %v535 = vadd.f32 %v317, %v534
    %v536 = vpop.f32.mrb[0].mxu0
    %v537 = vpop.f32.mrb[0].mxu0
    %v538 = vadd.f32 %v317, %v537
    %v539 = vpop.f32.mrb[0].mxu0
    %540 = vmatprep.mubr.bf16.mxu0 %v245
    %541 = vmatmul.mubr.bf16.gmra.mrb[0].mxu0 %v244
    %v542 = vpop.f32.mrb[0].mxu0
    %v543 = vadd.f32 %v317, %v542
    %v544 = vpop.f32.mrb[0].mxu0
    %v545 = vpop.f32.mrb[0].mxu0
    %v546 = vadd.f32 %v317, %v545
    %v547 = vpop.f32.mrb[0].mxu0
    %548 = vdwg.mxu0
    %549 = vmatprep.subr.bf16.mxu0 0
    %550 = vmatpush1.bf16.msra.mxu0 %v447
    %551 = vmatprep.subr.bf16.mxu0 0
    %552 = vmatpush1.bf16.msra.mxu0 %v448
    %553 = vmatprep.subr.bf16.mxu0 0
    %554 = vmatpush1.bf16.msra.mxu0 %v449
    %555 = vmatprep.subr.bf16.mxu0 0
    %556 = vmatpush1.bf16.msra.mxu0 %v450
    %557 = vmatprep.subr.bf16.mxu0 0
    %558 = vmatpush1.bf16.msra.mxu0 %v451
    %559 = vmatprep.subr.bf16.mxu0 0
    %560 = vmatpush1.bf16.msra.mxu0 %v452
    %561 = vmatprep.subr.bf16.mxu0 0
    %562 = vmatpush1.bf16.msra.mxu0 %v453
    %563 = vmatprep.subr.bf16.mxu0 0
    %564 = vmatpush1.bf16.msra.mxu0 %v454
    %565 = vmatprep.subr.bf16.mxu0 0
    %566 = vmatpush1.bf16.msra.mxu0 %v455
    %567 = vmatprep.subr.bf16.mxu0 0
    %568 = vmatpush1.bf16.msra.mxu0 %v456
    %569 = vmatprep.subr.bf16.mxu0 0
    %570 = vmatpush1.bf16.msra.mxu0 %v457
    %571 = vmatprep.subr.bf16.mxu0 0
    %572 = vmatpush1.bf16.msra.mxu0 %v498
    %573 = vmatprep.subr.bf16.mxu0 0
    %574 = vmatpush1.bf16.msra.mxu0 0
    %575 = vmatprep.subr.bf16.mxu0 0
    %576 = vmatpush1.bf16.msra.mxu0 0
    %577 = vmatprep.subr.bf16.mxu0 0
    %578 = vmatpush1.bf16.msra.mxu0 0
    %579 = vmatprep.subr.bf16.mxu0 0
    %580 = vmatpush1.bf16.msra.mxu0 0
    %581 = vmatprep.mubr.bf16.mxu0 %v488
    %582 = vmatmul.mubr.bf16.gmra.mrb[0].mxu0 %v242
    %v583 = vpop.f32.mrb[0].mxu0
    %v584 = vadd.f32 %v535, %v583
    %v585 = vpop.f32.mrb[0].mxu0
    %v586 = vpop.f32.mrb[0].mxu0
    %v587 = vadd.f32 %v538, %v586
    %v588 = vpop.f32.mrb[0].mxu0
    %589 = vmatprep.mubr.bf16.mxu0 %v491
    %590 = vmatmul.mubr.bf16.gmra.mrb[0].mxu0 %v246
    %v591 = vpop.f32.mrb[0].mxu0
    %v592 = vadd.f32 %v543, %v591
    %v593 = vpop.f32.mrb[0].mxu0
    %v594 = vpop.f32.mrb[0].mxu0
    %v595 = vadd.f32 %v546, %v594
    %v596 = vpop.f32.mrb[0].mxu0
    %597 = vdwg.mxu0
    %v598 = vmax.f32 %v584, 0.0
    %v599 = vmax.f32 %v587, 0.0
    %v600 = vmax.f32 %v592, 0.0
    %v601 = vmax.f32 %v595, 0.0
    %v602 = vpack.c.bf16 %v599, %v598
    %v603 = vpack.c.bf16 %v601, %v600
    %v604 = vld [vmem:[#allocation9] sm:$0xf]
    %v605 = vld [vmem:[#allocation9 + $0x4] sm:$0xf]
    %v606 = vld [vmem:[#allocation9 + $0x8] sm:$0xf]
    %v607 = vld [vmem:[#allocation9 + $0xc] sm:$0xf]
    %v608 = vld [vmem:[#allocation9 + $0x10] sm:$0xf]
    %v609 = vld [vmem:[#allocation9 + $0x14] sm:$0xf]
    %v610 = vld [vmem:[#allocation9 + $0x18] sm:$0xf]
    %v611 = vld [vmem:[#allocation9 + $0x1c] sm:$0xf]
    %v612 = vld [vmem:[#allocation11] sm:$0x1]
    %v614 = vlaneseq
    %v615 = vshrl.u32 %v614, 7
    %v616 = vsub.s32 0, %v615
    %v617 = vrot.slane %v612, %v616
    %v627 = vunpack.c.l.b16 %v604
    %v628 = vunpack.c.l.b16 %v605
    %v629 = vunpack.c.l.b16 %v606
    %v630 = vunpack.c.l.b16 %v607
    %v631 = vunpack.c.l.b16 %v608
    %v632 = vunpack.c.l.b16 %v609
    %v633 = vunpack.c.l.b16 %v610
    %v634 = vunpack.c.l.b16 %v611
    %v635 = vpack.c.b16 %v628, %v627
    %v636 = vpack.c.b16 %v630, %v629
    %v637 = vpack.c.b16 %v632, %v631
    %v638 = vpack.c.b16 %v634, %v633
    %vm643 = vcmask 523264
    %v645 = vsel %vm643, %v602, 0
    %v648 = vsel %vm643, %v603, 0
    %650 = vmatprep.subr.bf16.mxu0 0
    %651 = vmatpush1.bf16.msra.mxu0 %v635
    %652 = vmatprep.subr.bf16.mxu0 0
    %653 = vmatpush1.bf16.msra.mxu0 %v636
    %654 = vmatprep.subr.bf16.mxu0 0
    %655 = vmatpush1.bf16.msra.mxu0 %v637
    %656 = vmatprep.subr.bf16.mxu0 0
    %657 = vmatpush1.bf16.msra.mxu0 %v638
    %658 = vmatprep.subr.bf16.mxu0 0
    %659 = vmatpush1.bf16.msra.mxu0 0
    %660 = vmatprep.subr.bf16.mxu0 0
    %661 = vmatpush1.bf16.msra.mxu0 0
    %662 = vmatprep.subr.bf16.mxu0 0
    %663 = vmatpush1.bf16.msra.mxu0 0
    %664 = vmatprep.subr.bf16.mxu0 0
    %665 = vmatpush1.bf16.msra.mxu0 0
    %666 = vmatprep.subr.bf16.mxu0 0
    %667 = vmatpush1.bf16.msra.mxu0 0
    %668 = vmatprep.subr.bf16.mxu0 0
    %669 = vmatpush1.bf16.msra.mxu0 0
    %670 = vmatprep.subr.bf16.mxu0 0
    %671 = vmatpush1.bf16.msra.mxu0 0
    %672 = vmatprep.subr.bf16.mxu0 0
    %673 = vmatpush1.bf16.msra.mxu0 0
    %674 = vmatprep.subr.bf16.mxu0 0
    %675 = vmatpush1.bf16.msra.mxu0 0
    %676 = vmatprep.subr.bf16.mxu0 0
    %677 = vmatpush1.bf16.msra.mxu0 0
    %678 = vmatprep.subr.bf16.mxu0 0
    %679 = vmatpush1.bf16.msra.mxu0 0
    %680 = vmatprep.subr.bf16.mxu0 0
    %681 = vmatpush1.bf16.msra.mxu0 0
    %682 = vmatprep.mubr.bf16.mxu0 0
    %683 = vmatmul.mubr.bf16.gmra.mrb[0].mxu0 %v645
    %v684 = vpop.f32.mrb[0].mxu0
    %v685 = vadd.f32 %v617, %v684
    %v686 = vpop.f32.mrb[0].mxu0
    %v687 = vpop.f32.mrb[0].mxu0
    %v688 = vadd.f32 %v617, %v687
    %v689 = vpop.f32.mrb[0].mxu0
    %690 = vmatprep.mubr.bf16.mxu0 0
    %691 = vmatmul.mubr.bf16.gmra.mrb[0].mxu0 %v648
    %v692 = vpop.f32.mrb[0].mxu0
    %v693 = vadd.f32 %v617, %v692
    %v694 = vpop.f32.mrb[0].mxu0
    %v695 = vpop.f32.mrb[0].mxu0
    %v696 = vadd.f32 %v617, %v695
    %v697 = vpop.f32.mrb[0].mxu0
    %698 = vdwg.mxu0
    %v699 = vmax.f32 %v685, 0.0
    %v700 = vmax.f32 %v688, 0.0
    %v701 = vmax.f32 %v693, 0.0
    %v702 = vmax.f32 %v696, 0.0
    %v703 = vld [vmem:[#allocation12] sm:$0x1]
    %v705 = vlaneseq
    %v706 = vshrl.u32 %v705, 7
    %v707 = vsub.s32 0, %v706
    %v708 = vrot.slane %v703, %v707
    %v710 = vmul.f32 %v699, %v708
    %v711 = vmul.f32 %v700, %v708
    %v712 = vmul.f32 %v701, %v708
    %v713 = vmul.f32 %v702, %v708
    %v714 = vsel %vm643, %v710, 0.0
    %715 = vadd.xlane.f32.xlu0 %v714
    %v716 = vpop.xlane.xlu0 %715
    %v717 = vsel %vm643, %v711, 0.0
    %718 = vadd.xlane.f32.xlu0 %v717
    %v719 = vpop.xlane.xlu0 %718
    %v720 = vsel %vm643, %v712, 0.0
    %721 = vadd.xlane.f32.xlu0 %v720
    %v722 = vpop.xlane.xlu0 %721
    %v723 = vsel %vm643, %v713, 0.0
    %724 = vadd.xlane.f32.xlu0 %v723
    %v725 = vpop.xlane.xlu0 %724
    %v726 = vld [vmem:[#allocation2] sm:$0x1]
    %v728 = vlaneseq
    %v729 = vshrl.u32 %v728, 7
    %v730 = vsub.s32 0, %v729
    %v731 = vrot.slane %v726, %v730
    %v733 = vadd.f32 %v716, %v731
    %v734 = vadd.f32 %v719, %v731
    %v735 = vadd.f32 %v722, %v731
    %v736 = vadd.f32 %v725, %v731
    %v737 = vld [vmem:[%s8] sm:$0xff]
    %v738 = vld [vmem:[%s8 + $0x8] sm:$0xff]
    %v739 = vld [vmem:[%s8 + $0x10] sm:$0xff]
    %v740 = vld [vmem:[%s8 + $0x18] sm:$0xff]
    %v741 = vld [vmem:[%s8 + $0x20] sm:$0xff]
    %v742 = vld [vmem:[%s8 + $0x28] sm:$0xff]
    %v743 = vld [vmem:[%s8 + $0x30] sm:$0xff]
    %v744 = vld [vmem:[%s8 + $0x38] sm:$0xff]
    %v745 = vld [vmem:[%s8 + $0x40] sm:$0xff]
    %v746 = vld [vmem:[%s8 + $0x48] sm:$0xff]
    %v747 = vld [vmem:[%s8 + $0x50] sm:$0xff]
    %v748 = vld [vmem:[%s8 + $0x58] sm:$0xff]
    %v749 = vld [vmem:[%s8 + $0x60] sm:$0xff]
    %v750 = vld [vmem:[%s8 + $0x68] sm:$0xff]
    %v751 = vld [vmem:[%s8 + $0x70] sm:$0xff]
    %v752 = vld [vmem:[%s8 + $0x78] sm:$0xff]
    %v753 = vld [vmem:[%s8 + $0x80] sm:$0xff]
    %v754 = vld [vmem:[%s8 + $0x88] sm:$0xff]
    %v755 = vld [vmem:[%s8 + $0x90] sm:$0xff]
    %v756 = vld [vmem:[%s8 + $0x98] sm:$0xff]
    %v757 = vld [vmem:[%s8 + $0xa0] sm:$0xff]
    %v758 = vld [vmem:[%s8 + $0xa8] sm:$0xff]
    %v759 = vld [vmem:[%s8 + $0xb0] sm:$0xff]
    %v760 = vld [vmem:[%s8 + $0xb8] sm:$0xff]
    %v761 = vld [vmem:[%s8 + $0xc0] sm:$0xff]
    %v762 = vld [vmem:[%s8 + $0xc8] sm:$0xff]
    %v763 = vld [vmem:[%s8 + $0xd0] sm:$0xff]
    %v764 = vld [vmem:[%s8 + $0xd8] sm:$0xff]
    %v765 = vld [vmem:[%s8 + $0xe0] sm:$0xff]
    %v766 = vld [vmem:[%s8 + $0xe8] sm:$0xff]
    %v767 = vld [vmem:[%s8 + $0xf0] sm:$0xff]
    %v768 = vld [vmem:[%s8 + $0xf8] sm:$0xff]
    %v769 = vld [vmem:[%s8 + $0x100] sm:$0xff]
    %v770 = vld [vmem:[%s8 + $0x108] sm:$0xff]
    %v771 = vld [vmem:[%s8 + $0x110] sm:$0xff]
    %v772 = vld [vmem:[%s8 + $0x118] sm:$0xff]
    %v773 = vld [vmem:[%s8 + $0x120] sm:$0xff]
    %v774 = vld [vmem:[%s8 + $0x128] sm:$0xff]
    %v775 = vld [vmem:[%s8 + $0x130] sm:$0xff]
    %v776 = vld [vmem:[%s8 + $0x138] sm:$0xff]
    %v777 = vld [vmem:[%s8 + $0x140] sm:$0xff]
    %v778 = vld [vmem:[%s8 + $0x148] sm:$0xff]
    %v779 = vld [vmem:[%s8 + $0x150] sm:$0xff]
    %v780 = vld [vmem:[%s8 + $0x158] sm:$0xff]
    %v781 = vld [vmem:[%s8 + $0x160] sm:$0xff]
    %v782 = vld [vmem:[%s8 + $0x168] sm:$0xff]
    %v783 = vld [vmem:[%s8 + $0x170] sm:$0xff]
    %v784 = vld [vmem:[%s8 + $0x178] sm:$0xff]
    %v785 = vld [vmem:[%s8 + $0x180] sm:$0xff]
    %v786 = vld [vmem:[%s8 + $0x188] sm:$0xff]
    %v787 = vld [vmem:[%s8 + $0x190] sm:$0xff]
    %v788 = vld [vmem:[%s8 + $0x198] sm:$0xff]
    %v789 = vld [vmem:[%s8 + $0x1a0] sm:$0xff]
    %v790 = vld [vmem:[%s8 + $0x1a8] sm:$0xff]
    %v791 = vld [vmem:[%s8 + $0x1b0] sm:$0xff]
    %v792 = vld [vmem:[%s8 + $0x1b8] sm:$0x11]
    %v793 = vld [vmem:[#allocation14] sm:$0xff]
    %v794 = vld [vmem:[#allocation14 + $0x8] sm:$0xff]
    %v795 = vld [vmem:[#allocation14 + $0x10] sm:$0xff]
    %v796 = vld [vmem:[#allocation14 + $0x18] sm:$0xff]
    %v797 = vld [vmem:[#allocation14 + $0x20] sm:$0xff]
    %v798 = vld [vmem:[#allocation14 + $0x28] sm:$0xff]
    %v799 = vld [vmem:[#allocation14 + $0x30] sm:$0xff]
    %v800 = vld [vmem:[#allocation14 + $0x38] sm:$0xff]
    %v801 = vld [vmem:[#allocation14 + $0x40] sm:$0xff]
    %v802 = vld [vmem:[#allocation14 + $0x48] sm:$0xff]
    %v803 = vld [vmem:[#allocation14 + $0x50] sm:$0xff]
    %v804 = vld [vmem:[#allocation14 + $0x58] sm:$0xff]
    %v805 = vld [vmem:[#allocation14 + $0x60] sm:$0xff]
    %v806 = vld [vmem:[#allocation14 + $0x68] sm:$0xff]
    %v807 = vld [vmem:[#allocation14 + $0x70] sm:$0xff]
    %v808 = vld [vmem:[#allocation14 + $0x78] sm:$0xff]
    %v809 = vld [vmem:[#allocation14 + $0x80] sm:$0xff]
    %v810 = vld [vmem:[#allocation14 + $0x88] sm:$0xff]
    %v811 = vld [vmem:[#allocation14 + $0x90] sm:$0xff]
    %v812 = vld [vmem:[#allocation14 + $0x98] sm:$0xff]
    %v813 = vld [vmem:[#allocation14 + $0xa0] sm:$0xff]
    %v814 = vld [vmem:[#allocation14 + $0xa8] sm:$0xff]
    %v815 = vld [vmem:[#allocation14 + $0xb0] sm:$0xff]
    %v816 = vld [vmem:[#allocation14 + $0xb8] sm:$0xff]
    %v817 = vld [vmem:[#allocation14 + $0xc0] sm:$0xff]
    %v818 = vld [vmem:[#allocation14 + $0xc8] sm:$0xff]
    %v819 = vld [vmem:[#allocation14 + $0xd0] sm:$0xff]
    %v820 = vld [vmem:[#allocation14 + $0xd8] sm:$0xff]
    %v821 = vld [vmem:[#allocation14 + $0xe0] sm:$0xff]
    %v822 = vld [vmem:[#allocation14 + $0xe8] sm:$0xff]
    %v823 = vld [vmem:[#allocation14 + $0xf0] sm:$0xff]
    %v824 = vld [vmem:[#allocation14 + $0xf8] sm:$0xff]
    %v825 = vld [vmem:[#allocation14 + $0x100] sm:$0xff]
    %v826 = vld [vmem:[#allocation14 + $0x108] sm:$0xff]
    %v827 = vld [vmem:[#allocation14 + $0x110] sm:$0xff]
    %v828 = vld [vmem:[#allocation14 + $0x118] sm:$0xff]
    %v829 = vld [vmem:[#allocation14 + $0x120] sm:$0xff]
    %v830 = vld [vmem:[#allocation14 + $0x128] sm:$0xff]
    %v831 = vld [vmem:[#allocation14 + $0x130] sm:$0xff]
    %v832 = vld [vmem:[#allocation14 + $0x138] sm:$0xff]
    %v833 = vld [vmem:[#allocation14 + $0x140] sm:$0xff]
    %v834 = vld [vmem:[#allocation14 + $0x148] sm:$0xff]
    %v835 = vld [vmem:[#allocation14 + $0x150] sm:$0xff]
    %v836 = vld [vmem:[#allocation14 + $0x158] sm:$0xff]
    %v837 = vld [vmem:[#allocation14 + $0x160] sm:$0xff]
    %v838 = vld [vmem:[#allocation14 + $0x168] sm:$0xff]
    %v839 = vld [vmem:[#allocation14 + $0x170] sm:$0xff]
    %v840 = vld [vmem:[#allocation14 + $0x178] sm:$0xff]
    %v841 = vld [vmem:[#allocation14 + $0x180] sm:$0xff]
    %v842 = vld [vmem:[#allocation14 + $0x188] sm:$0xff]
    %v843 = vld [vmem:[#allocation14 + $0x190] sm:$0xff]
    %v844 = vld [vmem:[#allocation14 + $0x198] sm:$0xff]
    %v845 = vld [vmem:[#allocation14 + $0x1a0] sm:$0xff]
    %v846 = vld [vmem:[#allocation14 + $0x1a8] sm:$0xff]
    %v847 = vld [vmem:[#allocation14 + $0x1b0] sm:$0xff]
    %v848 = vld [vmem:[#allocation14 + $0x1b8] sm:$0x11]
    %v905 = vunpack.c.l.b16 %v793
    %v906 = vunpack.c.h.b16 %v793
    %v907 = vunpack.c.l.b16 %v794
    %v908 = vunpack.c.h.b16 %v794
    %v909 = vunpack.c.l.b16 %v795
    %v910 = vunpack.c.h.b16 %v795
    %v911 = vunpack.c.l.b16 %v796
    %v912 = vunpack.c.h.b16 %v796
    %v913 = vunpack.c.l.b16 %v797
    %v914 = vunpack.c.h.b16 %v797
    %v915 = vunpack.c.l.b16 %v798
    %v916 = vunpack.c.h.b16 %v798
    %v917 = vunpack.c.l.b16 %v799
    %v918 = vunpack.c.h.b16 %v799
    %v919 = vunpack.c.l.b16 %v800
    %v920 = vunpack.c.h.b16 %v800
    %v921 = vunpack.c.l.b16 %v801
    %v922 = vunpack.c.h.b16 %v801
    %v923 = vunpack.c.l.b16 %v802
    %v924 = vunpack.c.h.b16 %v802
    %v925 = vunpack.c.l.b16 %v803
    %v926 = vunpack.c.h.b16 %v803
    %v927 = vunpack.c.l.b16 %v804
    %v928 = vunpack.c.h.b16 %v804
    %v929 = vunpack.c.l.b16 %v805
    %v930 = vunpack.c.h.b16 %v805
    %v931 = vunpack.c.l.b16 %v806
    %v932 = vunpack.c.h.b16 %v806
    %v933 = vunpack.c.l.b16 %v807
    %v934 = vunpack.c.h.b16 %v807
    %v935 = vunpack.c.l.b16 %v808
    %v936 = vunpack.c.h.b16 %v808
    %v937 = vunpack.c.l.b16 %v809
    %v938 = vunpack.c.h.b16 %v809
    %v939 = vunpack.c.l.b16 %v810
    %v940 = vunpack.c.h.b16 %v810
    %v941 = vunpack.c.l.b16 %v811
    %v942 = vunpack.c.h.b16 %v811
    %v943 = vunpack.c.l.b16 %v812
    %v944 = vunpack.c.h.b16 %v812
    %v945 = vunpack.c.l.b16 %v813
    %v946 = vunpack.c.h.b16 %v813
    %v947 = vunpack.c.l.b16 %v814
    %v948 = vunpack.c.h.b16 %v814
    %v949 = vunpack.c.l.b16 %v815
    %v950 = vunpack.c.h.b16 %v815
    %v951 = vunpack.c.l.b16 %v816
    %v952 = vunpack.c.h.b16 %v816
    %v953 = vunpack.c.l.b16 %v817
    %v954 = vunpack.c.h.b16 %v817
    %v955 = vunpack.c.l.b16 %v818
    %v956 = vunpack.c.h.b16 %v818
    %v957 = vunpack.c.l.b16 %v819
    %v958 = vunpack.c.h.b16 %v819
    %v959 = vunpack.c.l.b16 %v820
    %v960 = vunpack.c.h.b16 %v820
    %v961 = vunpack.c.l.b16 %v821
    %v962 = vunpack.c.h.b16 %v821
    %v963 = vunpack.c.l.b16 %v822
    %v964 = vunpack.c.h.b16 %v822
    %v965 = vunpack.c.l.b16 %v823
    %v966 = vunpack.c.h.b16 %v823
    %v967 = vunpack.c.l.b16 %v824
    %v968 = vunpack.c.h.b16 %v824
    %v969 = vunpack.c.l.b16 %v825
    %v970 = vunpack.c.h.b16 %v825
    %v971 = vunpack.c.l.b16 %v826
    %v972 = vunpack.c.h.b16 %v826
    %v973 = vunpack.c.l.b16 %v827
    %v974 = vunpack.c.h.b16 %v827
    %v975 = vunpack.c.l.b16 %v828
    %v976 = vunpack.c.h.b16 %v828
    %v977 = vunpack.c.l.b16 %v829
    %v978 = vunpack.c.h.b16 %v829
    %v979 = vunpack.c.l.b16 %v830
    %v980 = vunpack.c.h.b16 %v830
    %v981 = vunpack.c.l.b16 %v831
    %v982 = vunpack.c.h.b16 %v831
    %v983 = vunpack.c.l.b16 %v832
    %v984 = vunpack.c.h.b16 %v832
    %v985 = vunpack.c.l.b16 %v833
    %v986 = vunpack.c.h.b16 %v833
    %v987 = vunpack.c.l.b16 %v834
    %v988 = vunpack.c.h.b16 %v834
    %v989 = vunpack.c.l.b16 %v835
    %v990 = vunpack.c.h.b16 %v835
    %v991 = vunpack.c.l.b16 %v836
    %v992 = vunpack.c.h.b16 %v836
    %v993 = vunpack.c.l.b16 %v837
    %v994 = vunpack.c.h.b16 %v837
    %v995 = vunpack.c.l.b16 %v838
    %v996 = vunpack.c.h.b16 %v838
    %v997 = vunpack.c.l.b16 %v839
    %v998 = vunpack.c.h.b16 %v839
    %v999 = vunpack.c.l.b16 %v840
    %v1000 = vunpack.c.h.b16 %v840
    %v1001 = vunpack.c.l.b16 %v841
    %v1002 = vunpack.c.h.b16 %v841
    %v1003 = vunpack.c.l.b16 %v842
    %v1004 = vunpack.c.h.b16 %v842
    %v1005 = vunpack.c.l.b16 %v843
    %v1006 = vunpack.c.h.b16 %v843
    %v1007 = vunpack.c.l.b16 %v844
    %v1008 = vunpack.c.h.b16 %v844
    %v1009 = vunpack.c.l.b16 %v845
    %v1010 = vunpack.c.h.b16 %v845
    %v1011 = vunpack.c.l.b16 %v846
    %v1012 = vunpack.c.h.b16 %v846
    %v1013 = vunpack.c.l.b16 %v847
    %v1014 = vunpack.c.h.b16 %v847
    %v1015 = vunpack.c.l.b16 %v848
    %v1016 = vunpack.c.h.b16 %v848
    %v1017 = vpack.c.b16 %v907, %v905
    %v1018 = vpack.c.b16 %v908, %v906
    %v1019 = vpack.c.b16 %v911, %v909
    %v1020 = vpack.c.b16 %v912, %v910
    %v1021 = vpack.c.b16 %v915, %v913
    %v1022 = vpack.c.b16 %v916, %v914
    %v1023 = vpack.c.b16 %v919, %v917
    %v1024 = vpack.c.b16 %v920, %v918
    %v1025 = vpack.c.b16 %v923, %v921
    %v1026 = vpack.c.b16 %v924, %v922
    %v1027 = vpack.c.b16 %v927, %v925
    %v1028 = vpack.c.b16 %v928, %v926
    %v1029 = vpack.c.b16 %v931, %v929
    %v1030 = vpack.c.b16 %v932, %v930
    %v1031 = vpack.c.b16 %v935, %v933
    %v1032 = vpack.c.b16 %v936, %v934
    %v1033 = vpack.c.b16 %v939, %v937
    %v1034 = vpack.c.b16 %v940, %v938
    %v1035 = vpack.c.b16 %v943, %v941
    %v1036 = vpack.c.b16 %v944, %v942
    %v1037 = vpack.c.b16 %v947, %v945
    %v1038 = vpack.c.b16 %v948, %v946
    %v1039 = vpack.c.b16 %v951, %v949
    %v1040 = vpack.c.b16 %v952, %v950
    %v1041 = vpack.c.b16 %v955, %v953
    %v1042 = vpack.c.b16 %v956, %v954
    %v1043 = vpack.c.b16 %v959, %v957
    %v1044 = vpack.c.b16 %v960, %v958
    %v1045 = vpack.c.b16 %v963, %v961
    %v1046 = vpack.c.b16 %v964, %v962
    %v1047 = vpack.c.b16 %v967, %v965
    %v1048 = vpack.c.b16 %v968, %v966
    %v1049 = vpack.c.b16 %v971, %v969
    %v1050 = vpack.c.b16 %v972, %v970
    %v1051 = vpack.c.b16 %v975, %v973
    %v1052 = vpack.c.b16 %v976, %v974
    %v1053 = vpack.c.b16 %v979, %v977
    %v1054 = vpack.c.b16 %v980, %v978
    %v1055 = vpack.c.b16 %v983, %v981
    %v1056 = vpack.c.b16 %v984, %v982
    %v1057 = vpack.c.b16 %v987, %v985
    %v1058 = vpack.c.b16 %v988, %v986
    %v1059 = vpack.c.b16 %v991, %v989
    %v1060 = vpack.c.b16 %v992, %v990
    %v1061 = vpack.c.b16 %v995, %v993
    %v1062 = vpack.c.b16 %v996, %v994
    %v1063 = vpack.c.b16 %v999, %v997
    %v1064 = vpack.c.b16 %v1000, %v998
    %v1065 = vpack.c.b16 %v1003, %v1001
    %v1066 = vpack.c.b16 %v1004, %v1002
    %v1067 = vpack.c.b16 %v1007, %v1005
    %v1068 = vpack.c.b16 %v1008, %v1006
    %v1069 = vpack.c.b16 %v1011, %v1009
    %v1070 = vpack.c.b16 %v1012, %v1010
    %v1071 = vpack.c.b16 %v1015, %v1013
    %v1072 = vpack.c.b16 %v1016, %v1014
    %v1128 = vand.u32 %v1071, %v496
    %v1131 = vand.u32 %v1072, %v496
    %1133 = vmatprep.subr.bf16.mxu0 %v1018
    %1134 = vmatpush1.bf16.msra.mxu0 %v1017
    %1135 = vmatprep.subr.bf16.mxu0 %v1020
    %1136 = vmatpush1.bf16.msra.mxu0 %v1019
    %1137 = vmatprep.subr.bf16.mxu0 %v1022
    %1138 = vmatpush1.bf16.msra.mxu0 %v1021
    %1139 = vmatprep.subr.bf16.mxu0 %v1024
    %1140 = vmatpush1.bf16.msra.mxu0 %v1023
    %1141 = vmatprep.subr.bf16.mxu0 %v1026
    %1142 = vmatpush1.bf16.msra.mxu0 %v1025
    %1143 = vmatprep.subr.bf16.mxu0 %v1028
    %1144 = vmatpush1.bf16.msra.mxu0 %v1027
    %1145 = vmatprep.subr.bf16.mxu0 %v1030
    %1146 = vmatpush1.bf16.msra.mxu0 %v1029
    %1147 = vmatprep.subr.bf16.mxu0 %v1032
    %1148 = vmatpush1.bf16.msra.mxu0 %v1031
    %1149 = vmatprep.subr.bf16.mxu0 %v1034
    %1150 = vmatpush1.bf16.msra.mxu0 %v1033
    %1151 = vmatprep.subr.bf16.mxu0 %v1036
    %1152 = vmatpush1.bf16.msra.mxu0 %v1035
    %1153 = vmatprep.subr.bf16.mxu0 %v1038
    %1154 = vmatpush1.bf16.msra.mxu0 %v1037
    %1155 = vmatprep.subr.bf16.mxu0 %v1040
    %1156 = vmatpush1.bf16.msra.mxu0 %v1039
    %1157 = vmatprep.subr.bf16.mxu0 %v1042
    %1158 = vmatpush1.bf16.msra.mxu0 %v1041
    %1159 = vmatprep.subr.bf16.mxu0 %v1044
    %1160 = vmatpush1.bf16.msra.mxu0 %v1043
    %1161 = vmatprep.subr.bf16.mxu0 %v1046
    %1162 = vmatpush1.bf16.msra.mxu0 %v1045
    %1163 = vmatprep.subr.bf16.mxu0 %v1048
    %1164 = vmatpush1.bf16.msra.mxu0 %v1047
    %1165 = vmatprep.mubr.bf16.mxu0 %v241
    %1166 = vmatmul.mubr.bf16.gmra.mrb[0].mxu0 %v240
    %v1167 = vpop.f32.mrb[0].mxu0
    %v1168 = vadd.f32 0.0, %v1167
    %v1169 = vpop.f32.mrb[0].mxu0
    %v1170 = vadd.f32 0.0, %v1169
    %v1171 = vpop.f32.mrb[0].mxu0
    %v1172 = vadd.f32 0.0, %v1171
    %v1173 = vpop.f32.mrb[0].mxu0
    %v1174 = vadd.f32 0.0, %v1173
    %1175 = vmatprep.mubr.bf16.mxu0 %v245
    %1176 = vmatmul.mubr.bf16.gmra.mrb[0].mxu0 %v244
    %v1177 = vpop.f32.mrb[0].mxu0
    %v1178 = vadd.f32 0.0, %v1177
    %v1179 = vpop.f32.mrb[0].mxu0
    %v1180 = vadd.f32 0.0, %v1179
    %v1181 = vpop.f32.mrb[0].mxu0
    %v1182 = vadd.f32 0.0, %v1181
    %v1183 = vpop.f32.mrb[0].mxu0
    %v1184 = vadd.f32 0.0, %v1183
    %1185 = vdwg.mxu0
    %1186 = vmatprep.subr.bf16.mxu0 %v1050
    %1187 = vmatpush1.bf16.msra.mxu0 %v1049
    %1188 = vmatprep.subr.bf16.mxu0 %v1052
    %1189 = vmatpush1.bf16.msra.mxu0 %v1051
    %1190 = vmatprep.subr.bf16.mxu0 %v1054
    %1191 = vmatpush1.bf16.msra.mxu0 %v1053
    %1192 = vmatprep.subr.bf16.mxu0 %v1056
    %1193 = vmatpush1.bf16.msra.mxu0 %v1055
    %1194 = vmatprep.subr.bf16.mxu0 %v1058
    %1195 = vmatpush1.bf16.msra.mxu0 %v1057
    %1196 = vmatprep.subr.bf16.mxu0 %v1060
    %1197 = vmatpush1.bf16.msra.mxu0 %v1059
    %1198 = vmatprep.subr.bf16.mxu0 %v1062
    %1199 = vmatpush1.bf16.msra.mxu0 %v1061
    %1200 = vmatprep.subr.bf16.mxu0 %v1064
    %1201 = vmatpush1.bf16.msra.mxu0 %v1063
    %1202 = vmatprep.subr.bf16.mxu0 %v1066
    %1203 = vmatpush1.bf16.msra.mxu0 %v1065
    %1204 = vmatprep.subr.bf16.mxu0 %v1068
    %1205 = vmatpush1.bf16.msra.mxu0 %v1067
    %1206 = vmatprep.subr.bf16.mxu0 %v1070
    %1207 = vmatpush1.bf16.msra.mxu0 %v1069
    %1208 = vmatprep.subr.bf16.mxu0 %v1131
    %1209 = vmatpush1.bf16.msra.mxu0 %v1128
    %1210 = vmatprep.subr.bf16.mxu0 0
    %1211 = vmatpush1.bf16.msra.mxu0 0
    %1212 = vmatprep.subr.bf16.mxu0 0
    %1213 = vmatpush1.bf16.msra.mxu0 0
    %1214 = vmatprep.subr.bf16.mxu0 0
    %1215 = vmatpush1.bf16.msra.mxu0 0
    %1216 = vmatprep.subr.bf16.mxu0 0
    %1217 = vmatpush1.bf16.msra.mxu0 0
    %1218 = vmatprep.mubr.bf16.mxu0 %v488
    %1219 = vmatmul.mubr.bf16.gmra.mrb[0].mxu0 %v242
    %v1220 = vpop.f32.mrb[0].mxu0
    %v1221 = vadd.f32 %v1168, %v1220
    %v1222 = vpop.f32.mrb[0].mxu0
    %v1223 = vadd.f32 %v1170, %v1222
    %v1224 = vpop.f32.mrb[0].mxu0
    %v1225 = vadd.f32 %v1172, %v1224
    %v1226 = vpop.f32.mrb[0].mxu0
    %v1227 = vadd.f32 %v1174, %v1226
    %1228 = vmatprep.mubr.bf16.mxu0 %v491
    %1229 = vmatmul.mubr.bf16.gmra.mrb[0].mxu0 %v246
    %v1230 = vpop.f32.mrb[0].mxu0
    %v1231 = vadd.f32 %v1178, %v1230
    %v1232 = vpop.f32.mrb[0].mxu0
    %v1233 = vadd.f32 %v1180, %v1232
    %v1234 = vpop.f32.mrb[0].mxu0
    %v1235 = vadd.f32 %v1182, %v1234
    %v1236 = vpop.f32.mrb[0].mxu0
    %v1237 = vadd.f32 %v1184, %v1236
    %1238 = vdwg.mxu0
    %v1295 = vunpack.c.l.b16 %v737
    %v1296 = vunpack.c.h.b16 %v737
    %v1297 = vunpack.c.l.b16 %v738
    %v1298 = vunpack.c.h.b16 %v738
    %v1299 = vunpack.c.l.b16 %v739
    %v1300 = vunpack.c.h.b16 %v739
    %v1301 = vunpack.c.l.b16 %v740
    %v1302 = vunpack.c.h.b16 %v740
    %v1303 = vunpack.c.l.b16 %v741
    %v1304 = vunpack.c.h.b16 %v741
    %v1305 = vunpack.c.l.b16 %v742
    %v1306 = vunpack.c.h.b16 %v742
    %v1307 = vunpack.c.l.b16 %v743
    %v1308 = vunpack.c.h.b16 %v743
    %v1309 = vunpack.c.l.b16 %v744
    %v1310 = vunpack.c.h.b16 %v744
    %v1311 = vunpack.c.l.b16 %v745
    %v1312 = vunpack.c.h.b16 %v745
    %v1313 = vunpack.c.l.b16 %v746
    %v1314 = vunpack.c.h.b16 %v746
    %v1315 = vunpack.c.l.b16 %v747
    %v1316 = vunpack.c.h.b16 %v747
    %v1317 = vunpack.c.l.b16 %v748
    %v1318 = vunpack.c.h.b16 %v748
    %v1319 = vunpack.c.l.b16 %v749
    %v1320 = vunpack.c.h.b16 %v749
    %v1321 = vunpack.c.l.b16 %v750
    %v1322 = vunpack.c.h.b16 %v750
    %v1323 = vunpack.c.l.b16 %v751
    %v1324 = vunpack.c.h.b16 %v751
    %v1325 = vunpack.c.l.b16 %v752
    %v1326 = vunpack.c.h.b16 %v752
    %v1327 = vunpack.c.l.b16 %v753
    %v1328 = vunpack.c.h.b16 %v753
    %v1329 = vunpack.c.l.b16 %v754
    %v1330 = vunpack.c.h.b16 %v754
    %v1331 = vunpack.c.l.b16 %v755
    %v1332 = vunpack.c.h.b16 %v755
    %v1333 = vunpack.c.l.b16 %v756
    %v1334 = vunpack.c.h.b16 %v756
    %v1335 = vunpack.c.l.b16 %v757
    %v1336 = vunpack.c.h.b16 %v757
    %v1337 = vunpack.c.l.b16 %v758
    %v1338 = vunpack.c.h.b16 %v758
    %v1339 = vunpack.c.l.b16 %v759
    %v1340 = vunpack.c.h.b16 %v759
    %v1341 = vunpack.c.l.b16 %v760
    %v1342 = vunpack.c.h.b16 %v760
    %v1343 = vunpack.c.l.b16 %v761
    %v1344 = vunpack.c.h.b16 %v761
    %v1345 = vunpack.c.l.b16 %v762
    %v1346 = vunpack.c.h.b16 %v762
    %v1347 = vunpack.c.l.b16 %v763
    %v1348 = vunpack.c.h.b16 %v763
    %v1349 = vunpack.c.l.b16 %v764
    %v1350 = vunpack.c.h.b16 %v764
    %v1351 = vunpack.c.l.b16 %v765
    %v1352 = vunpack.c.h.b16 %v765
    %v1353 = vunpack.c.l.b16 %v766
    %v1354 = vunpack.c.h.b16 %v766
    %v1355 = vunpack.c.l.b16 %v767
    %v1356 = vunpack.c.h.b16 %v767
    %v1357 = vunpack.c.l.b16 %v768
    %v1358 = vunpack.c.h.b16 %v768
    %v1359 = vunpack.c.l.b16 %v769
    %v1360 = vunpack.c.h.b16 %v769
    %v1361 = vunpack.c.l.b16 %v770
    %v1362 = vunpack.c.h.b16 %v770
    %v1363 = vunpack.c.l.b16 %v771
    %v1364 = vunpack.c.h.b16 %v771
    %v1365 = vunpack.c.l.b16 %v772
    %v1366 = vunpack.c.h.b16 %v772
    %v1367 = vunpack.c.l.b16 %v773
    %v1368 = vunpack.c.h.b16 %v773
    %v1369 = vunpack.c.l.b16 %v774
    %v1370 = vunpack.c.h.b16 %v774
    %v1371 = vunpack.c.l.b16 %v775
    %v1372 = vunpack.c.h.b16 %v775
    %v1373 = vunpack.c.l.b16 %v776
    %v1374 = vunpack.c.h.b16 %v776
    %v1375 = vunpack.c.l.b16 %v777
    %v1376 = vunpack.c.h.b16 %v777
    %v1377 = vunpack.c.l.b16 %v778
    %v1378 = vunpack.c.h.b16 %v778
    %v1379 = vunpack.c.l.b16 %v779
    %v1380 = vunpack.c.h.b16 %v779
    %v1381 = vunpack.c.l.b16 %v780
    %v1382 = vunpack.c.h.b16 %v780
    %v1383 = vunpack.c.l.b16 %v781
    %v1384 = vunpack.c.h.b16 %v781
    %v1385 = vunpack.c.l.b16 %v782
    %v1386 = vunpack.c.h.b16 %v782
    %v1387 = vunpack.c.l.b16 %v783
    %v1388 = vunpack.c.h.b16 %v783
    %v1389 = vunpack.c.l.b16 %v784
    %v1390 = vunpack.c.h.b16 %v784
    %v1391 = vunpack.c.l.b16 %v785
    %v1392 = vunpack.c.h.b16 %v785
    %v1393 = vunpack.c.l.b16 %v786
    %v1394 = vunpack.c.h.b16 %v786
    %v1395 = vunpack.c.l.b16 %v787
    %v1396 = vunpack.c.h.b16 %v787
    %v1397 = vunpack.c.l.b16 %v788
    %v1398 = vunpack.c.h.b16 %v788
    %v1399 = vunpack.c.l.b16 %v789
    %v1400 = vunpack.c.h.b16 %v789
    %v1401 = vunpack.c.l.b16 %v790
    %v1402 = vunpack.c.h.b16 %v790
    %v1403 = vunpack.c.l.b16 %v791
    %v1404 = vunpack.c.h.b16 %v791
    %v1405 = vunpack.c.l.b16 %v792
    %v1406 = vunpack.c.h.b16 %v792
    %v1407 = vpack.c.b16 %v1297, %v1295
    %v1408 = vpack.c.b16 %v1298, %v1296
    %v1409 = vpack.c.b16 %v1301, %v1299
    %v1410 = vpack.c.b16 %v1302, %v1300
    %v1411 = vpack.c.b16 %v1305, %v1303
    %v1412 = vpack.c.b16 %v1306, %v1304
    %v1413 = vpack.c.b16 %v1309, %v1307
    %v1414 = vpack.c.b16 %v1310, %v1308
    %v1415 = vpack.c.b16 %v1313, %v1311
    %v1416 = vpack.c.b16 %v1314, %v1312
    %v1417 = vpack.c.b16 %v1317, %v1315
    %v1418 = vpack.c.b16 %v1318, %v1316
    %v1419 = vpack.c.b16 %v1321, %v1319
    %v1420 = vpack.c.b16 %v1322, %v1320
    %v1421 = vpack.c.b16 %v1325, %v1323
    %v1422 = vpack.c.b16 %v1326, %v1324
    %v1423 = vpack.c.b16 %v1329, %v1327
    %v1424 = vpack.c.b16 %v1330, %v1328
    %v1425 = vpack.c.b16 %v1333, %v1331
    %v1426 = vpack.c.b16 %v1334, %v1332
    %v1427 = vpack.c.b16 %v1337, %v1335
    %v1428 = vpack.c.b16 %v1338, %v1336
    %v1429 = vpack.c.b16 %v1341, %v1339
    %v1430 = vpack.c.b16 %v1342, %v1340
    %v1431 = vpack.c.b16 %v1345, %v1343
    %v1432 = vpack.c.b16 %v1346, %v1344
    %v1433 = vpack.c.b16 %v1349, %v1347
    %v1434 = vpack.c.b16 %v1350, %v1348
    %v1435 = vpack.c.b16 %v1353, %v1351
    %v1436 = vpack.c.b16 %v1354, %v1352
    %v1437 = vpack.c.b16 %v1357, %v1355
    %v1438 = vpack.c.b16 %v1358, %v1356
    %v1439 = vpack.c.b16 %v1361, %v1359
    %v1440 = vpack.c.b16 %v1362, %v1360
    %v1441 = vpack.c.b16 %v1365, %v1363
    %v1442 = vpack.c.b16 %v1366, %v1364
    %v1443 = vpack.c.b16 %v1369, %v1367
    %v1444 = vpack.c.b16 %v1370, %v1368
    %v1445 = vpack.c.b16 %v1373, %v1371
    %v1446 = vpack.c.b16 %v1374, %v1372
    %v1447 = vpack.c.b16 %v1377, %v1375
    %v1448 = vpack.c.b16 %v1378, %v1376
    %v1449 = vpack.c.b16 %v1381, %v1379
    %v1450 = vpack.c.b16 %v1382, %v1380
    %v1451 = vpack.c.b16 %v1385, %v1383
    %v1452 = vpack.c.b16 %v1386, %v1384
    %v1453 = vpack.c.b16 %v1389, %v1387
    %v1454 = vpack.c.b16 %v1390, %v1388
    %v1455 = vpack.c.b16 %v1393, %v1391
    %v1456 = vpack.c.b16 %v1394, %v1392
    %v1457 = vpack.c.b16 %v1397, %v1395
    %v1458 = vpack.c.b16 %v1398, %v1396
    %v1459 = vpack.c.b16 %v1401, %v1399
    %v1460 = vpack.c.b16 %v1402, %v1400
    %v1461 = vpack.c.b16 %v1405, %v1403
    %v1462 = vpack.c.b16 %v1406, %v1404
    %v1518 = vsel %vm486, %v251, 0
    %v1521 = vsel %vm486, %v255, 0
    %v1524 = vand.u32 %v1461, %v496
    %v1527 = vand.u32 %v1462, %v496
    %1529 = vmatprep.subr.bf16.mxu0 %v1408
    %1530 = vmatpush1.bf16.msra.mxu0 %v1407
    %1531 = vmatprep.subr.bf16.mxu0 %v1410
    %1532 = vmatpush1.bf16.msra.mxu0 %v1409
    %1533 = vmatprep.subr.bf16.mxu0 %v1412
    %1534 = vmatpush1.bf16.msra.mxu0 %v1411
    %1535 = vmatprep.subr.bf16.mxu0 %v1414
    %1536 = vmatpush1.bf16.msra.mxu0 %v1413
    %1537 = vmatprep.subr.bf16.mxu0 %v1416
    %1538 = vmatpush1.bf16.msra.mxu0 %v1415
    %1539 = vmatprep.subr.bf16.mxu0 %v1418
    %1540 = vmatpush1.bf16.msra.mxu0 %v1417
    %1541 = vmatprep.subr.bf16.mxu0 %v1420
    %1542 = vmatpush1.bf16.msra.mxu0 %v1419
    %1543 = vmatprep.subr.bf16.mxu0 %v1422
    %1544 = vmatpush1.bf16.msra.mxu0 %v1421
    %1545 = vmatprep.subr.bf16.mxu0 %v1424
    %1546 = vmatpush1.bf16.msra.mxu0 %v1423
    %1547 = vmatprep.subr.bf16.mxu0 %v1426
    %1548 = vmatpush1.bf16.msra.mxu0 %v1425
    %1549 = vmatprep.subr.bf16.mxu0 %v1428
    %1550 = vmatpush1.bf16.msra.mxu0 %v1427
    %1551 = vmatprep.subr.bf16.mxu0 %v1430
    %1552 = vmatpush1.bf16.msra.mxu0 %v1429
    %1553 = vmatprep.subr.bf16.mxu0 %v1432
    %1554 = vmatpush1.bf16.msra.mxu0 %v1431
    %1555 = vmatprep.subr.bf16.mxu0 %v1434
    %1556 = vmatpush1.bf16.msra.mxu0 %v1433
    %1557 = vmatprep.subr.bf16.mxu0 %v1436
    %1558 = vmatpush1.bf16.msra.mxu0 %v1435
    %1559 = vmatprep.subr.bf16.mxu0 %v1438
    %1560 = vmatpush1.bf16.msra.mxu0 %v1437
    %1561 = vmatprep.mubr.bf16.mxu0 %v249
    %1562 = vmatmul.mubr.bf16.gmra.mrb[0].mxu0 %v248
    %v1563 = vpop.f32.mrb[0].mxu0
    %v1564 = vadd.f32 %v1221, %v1563
    %v1565 = vpop.f32.mrb[0].mxu0
    %v1566 = vadd.f32 %v1223, %v1565
    %v1567 = vpop.f32.mrb[0].mxu0
    %v1568 = vadd.f32 %v1225, %v1567
    %v1569 = vpop.f32.mrb[0].mxu0
    %v1570 = vadd.f32 %v1227, %v1569
    %1571 = vmatprep.mubr.bf16.mxu0 %v253
    %1572 = vmatmul.mubr.bf16.gmra.mrb[0].mxu0 %v252
    %v1573 = vpop.f32.mrb[0].mxu0
    %v1574 = vadd.f32 %v1231, %v1573
    %v1575 = vpop.f32.mrb[0].mxu0
    %v1576 = vadd.f32 %v1233, %v1575
    %v1577 = vpop.f32.mrb[0].mxu0
    %v1578 = vadd.f32 %v1235, %v1577
    %v1579 = vpop.f32.mrb[0].mxu0
    %v1580 = vadd.f32 %v1237, %v1579
    %1581 = vdwg.mxu0
    %1582 = vmatprep.subr.bf16.mxu0 %v1440
    %1583 = vmatpush1.bf16.msra.mxu0 %v1439
    %1584 = vmatprep.subr.bf16.mxu0 %v1442
    %1585 = vmatpush1.bf16.msra.mxu0 %v1441
    %1586 = vmatprep.subr.bf16.mxu0 %v1444
    %1587 = vmatpush1.bf16.msra.mxu0 %v1443
    %1588 = vmatprep.subr.bf16.mxu0 %v1446
    %1589 = vmatpush1.bf16.msra.mxu0 %v1445
    %1590 = vmatprep.subr.bf16.mxu0 %v1448
    %1591 = vmatpush1.bf16.msra.mxu0 %v1447
    %1592 = vmatprep.subr.bf16.mxu0 %v1450
    %1593 = vmatpush1.bf16.msra.mxu0 %v1449
    %1594 = vmatprep.subr.bf16.mxu0 %v1452
    %1595 = vmatpush1.bf16.msra.mxu0 %v1451
    %1596 = vmatprep.subr.bf16.mxu0 %v1454
    %1597 = vmatpush1.bf16.msra.mxu0 %v1453
    %1598 = vmatprep.subr.bf16.mxu0 %v1456
    %1599 = vmatpush1.bf16.msra.mxu0 %v1455
    %1600 = vmatprep.subr.bf16.mxu0 %v1458
    %1601 = vmatpush1.bf16.msra.mxu0 %v1457
    %1602 = vmatprep.subr.bf16.mxu0 %v1460
    %1603 = vmatpush1.bf16.msra.mxu0 %v1459
    %1604 = vmatprep.subr.bf16.mxu0 %v1527
    %1605 = vmatpush1.bf16.msra.mxu0 %v1524
    %1606 = vmatprep.subr.bf16.mxu0 0
    %1607 = vmatpush1.bf16.msra.mxu0 0
    %1608 = vmatprep.subr.bf16.mxu0 0
    %1609 = vmatpush1.bf16.msra.mxu0 0
    %1610 = vmatprep.subr.bf16.mxu0 0
    %1611 = vmatpush1.bf16.msra.mxu0 0
    %1612 = vmatprep.subr.bf16.mxu0 0
    %1613 = vmatpush1.bf16.msra.mxu0 0
    %1614 = vmatprep.mubr.bf16.mxu0 %v1518
    %1615 = vmatmul.mubr.bf16.gmra.mrb[0].mxu0 %v250
    %v1616 = vpop.f32.mrb[0].mxu0
    %v1617 = vadd.f32 %v1564, %v1616
    %v1618 = vpop.f32.mrb[0].mxu0
    %v1619 = vadd.f32 %v1566, %v1618
    %v1620 = vpop.f32.mrb[0].mxu0
    %v1621 = vadd.f32 %v1568, %v1620
    %v1622 = vpop.f32.mrb[0].mxu0
    %v1623 = vadd.f32 %v1570, %v1622
    %1624 = vmatprep.mubr.bf16.mxu0 %v1521
    %1625 = vmatmul.mubr.bf16.gmra.mrb[0].mxu0 %v254
    %v1626 = vpop.f32.mrb[0].mxu0
    %v1627 = vadd.f32 %v1574, %v1626
    %v1628 = vpop.f32.mrb[0].mxu0
    %v1629 = vadd.f32 %v1576, %v1628
    %v1630 = vpop.f32.mrb[0].mxu0
    %v1631 = vadd.f32 %v1578, %v1630
    %v1632 = vpop.f32.mrb[0].mxu0
    %v1633 = vadd.f32 %v1580, %v1632
    %1634 = vdwg.mxu0
    %v1635 = vld [vmem:[%s10] sm:$0x3]
    %v1637 = vlaneseq
    %v1638 = vshrl.u32 %v1637, 7
    %v1639 = vsub.s32 0, %v1638
    %v1640 = vrot.slane %v1635, %v1639
    %v1641 = vlaneseq
    %v1642 = vshrl.u32 %v1641, 7
    %v1643 = vsub.s32 1, %v1642
    %v1644 = vrot.slane %v1635, %v1643
    %v1647 = vadd.f32 %v1617, %v1640
    %v1648 = vadd.f32 %v1619, %v1644
    %v1649 = vadd.f32 %v1621, %v1640
    %v1650 = vadd.f32 %v1623, %v1644
    %v1651 = vadd.f32 %v1627, %v1640
    %v1652 = vadd.f32 %v1629, %v1644
    %v1653 = vadd.f32 %v1631, %v1640
    %v1654 = vadd.f32 %v1633, %v1644
    %v1655 = vmax.f32 %v1647, 0.0
    %v1656 = vmax.f32 %v1648, 0.0
    %v1657 = vmax.f32 %v1649, 0.0
    %v1658 = vmax.f32 %v1650, 0.0
    %v1659 = vmax.f32 %v1651, 0.0
    %v1660 = vmax.f32 %v1652, 0.0
    %v1661 = vmax.f32 %v1653, 0.0
    %v1662 = vmax.f32 %v1654, 0.0
    %v1663 = vpack.c.bf16 %v1657, %v1655
    %v1664 = vpack.c.bf16 %v1658, %v1656
    %v1665 = vpack.c.bf16 %v1661, %v1659
    %v1666 = vpack.c.bf16 %v1662, %v1660
    %v1667 = vld [vmem:[#allocation15] sm:$0xf]
    %v1668 = vld [vmem:[#allocation15 + $0x4] sm:$0xf]
    %v1669 = vld [vmem:[#allocation15 + $0x8] sm:$0xf]
    %v1670 = vld [vmem:[#allocation15 + $0xc] sm:$0xf]
    %v1671 = vld [vmem:[#allocation15 + $0x10] sm:$0xf]
    %v1672 = vld [vmem:[#allocation15 + $0x14] sm:$0xf]
    %v1673 = vld [vmem:[#allocation15 + $0x18] sm:$0xf]
    %v1674 = vld [vmem:[#allocation15 + $0x1c] sm:$0xf]
    %v1675 = vld [vmem:[#allocation15 + $0x20] sm:$0xf]
    %v1676 = vld [vmem:[#allocation15 + $0x24] sm:$0xf]
    %v1677 = vld [vmem:[#allocation15 + $0x28] sm:$0xf]
    %v1678 = vld [vmem:[#allocation15 + $0x2c] sm:$0xf]
    %v1679 = vld [vmem:[#allocation15 + $0x30] sm:$0xf]
    %v1680 = vld [vmem:[#allocation15 + $0x34] sm:$0xf]
    %v1681 = vld [vmem:[#allocation15 + $0x38] sm:$0xf]
    %v1682 = vld [vmem:[#allocation15 + $0x3c] sm:$0xf]
    %v1683 = vld [vmem:[#allocation15 + $0x40] sm:$0xf]
    %v1684 = vld [vmem:[#allocation15 + $0x44] sm:$0xf]
    %v1685 = vld [vmem:[#allocation15 + $0x48] sm:$0xf]
    %v1686 = vld [vmem:[#allocation15 + $0x4c] sm:$0xf]
    %v1687 = vld [vmem:[#allocation15 + $0x50] sm:$0xf]
    %v1688 = vld [vmem:[#allocation15 + $0x54] sm:$0xf]
    %v1689 = vld [vmem:[#allocation15 + $0x58] sm:$0xf]
    %v1690 = vld [vmem:[#allocation15 + $0x5c] sm:$0xf]
    %v1691 = vld [vmem:[#allocation15 + $0x60] sm:$0xf]
    %v1692 = vld [vmem:[#allocation15 + $0x64] sm:$0xf]
    %v1693 = vld [vmem:[#allocation15 + $0x68] sm:$0xf]
    %v1694 = vld [vmem:[#allocation15 + $0x6c] sm:$0xf]
    %v1695 = vld [vmem:[#allocation15 + $0x70] sm:$0xf]
    %v1696 = vld [vmem:[#allocation15 + $0x74] sm:$0xf]
    %v1697 = vld [vmem:[#allocation15 + $0x78] sm:$0xf]
    %v1698 = vld [vmem:[#allocation15 + $0x7c] sm:$0xf]
    %v1699 = vld [vmem:[%s12] sm:$0x1]
    %v1701 = vlaneseq
    %v1702 = vshrl.u32 %v1701, 7
    %v1703 = vsub.s32 0, %v1702
    %v1704 = vrot.slane %v1699, %v1703
    %v1738 = vunpack.c.l.b16 %v1667
    %v1739 = vunpack.c.l.b16 %v1668
    %v1740 = vunpack.c.l.b16 %v1669
    %v1741 = vunpack.c.l.b16 %v1670
    %v1742 = vunpack.c.l.b16 %v1671
    %v1743 = vunpack.c.l.b16 %v1672
    %v1744 = vunpack.c.l.b16 %v1673
    %v1745 = vunpack.c.l.b16 %v1674
    %v1746 = vunpack.c.l.b16 %v1675
    %v1747 = vunpack.c.l.b16 %v1676
    %v1748 = vunpack.c.l.b16 %v1677
    %v1749 = vunpack.c.l.b16 %v1678
    %v1750 = vunpack.c.l.b16 %v1679
    %v1751 = vunpack.c.l.b16 %v1680
    %v1752 = vunpack.c.l.b16 %v1681
    %v1753 = vunpack.c.l.b16 %v1682
    %v1754 = vunpack.c.l.b16 %v1683
    %v1755 = vunpack.c.l.b16 %v1684
    %v1756 = vunpack.c.l.b16 %v1685
    %v1757 = vunpack.c.l.b16 %v1686
    %v1758 = vunpack.c.l.b16 %v1687
    %v1759 = vunpack.c.l.b16 %v1688
    %v1760 = vunpack.c.l.b16 %v1689
    %v1761 = vunpack.c.l.b16 %v1690
    %v1762 = vunpack.c.l.b16 %v1691
    %v1763 = vunpack.c.l.b16 %v1692
    %v1764 = vunpack.c.l.b16 %v1693
    %v1765 = vunpack.c.l.b16 %v1694
    %v1766 = vunpack.c.l.b16 %v1695
    %v1767 = vunpack.c.l.b16 %v1696
    %v1768 = vunpack.c.l.b16 %v1697
    %v1769 = vunpack.c.l.b16 %v1698
    %v1770 = vpack.c.b16 %v1739, %v1738
    %v1771 = vpack.c.b16 %v1741, %v1740
    %v1772 = vpack.c.b16 %v1743, %v1742
    %v1773 = vpack.c.b16 %v1745, %v1744
    %v1774 = vpack.c.b16 %v1747, %v1746
    %v1775 = vpack.c.b16 %v1749, %v1748
    %v1776 = vpack.c.b16 %v1751, %v1750
    %v1777 = vpack.c.b16 %v1753, %v1752
    %v1778 = vpack.c.b16 %v1755, %v1754
    %v1779 = vpack.c.b16 %v1757, %v1756
    %v1780 = vpack.c.b16 %v1759, %v1758
    %v1781 = vpack.c.b16 %v1761, %v1760
    %v1782 = vpack.c.b16 %v1763, %v1762
    %v1783 = vpack.c.b16 %v1765, %v1764
    %v1784 = vpack.c.b16 %v1767, %v1766
    %v1785 = vpack.c.b16 %v1769, %v1768
    %1802 = vmatprep.subr.bf16.mxu0 0
    %1803 = vmatpush1.bf16.msra.mxu0 %v1770
    %1804 = vmatprep.subr.bf16.mxu0 0
    %1805 = vmatpush1.bf16.msra.mxu0 %v1771
    %1806 = vmatprep.subr.bf16.mxu0 0
    %1807 = vmatpush1.bf16.msra.mxu0 %v1772
    %1808 = vmatprep.subr.bf16.mxu0 0
    %1809 = vmatpush1.bf16.msra.mxu0 %v1773
    %1810 = vmatprep.subr.bf16.mxu0 0
    %1811 = vmatpush1.bf16.msra.mxu0 %v1774
    %1812 = vmatprep.subr.bf16.mxu0 0
    %1813 = vmatpush1.bf16.msra.mxu0 %v1775
    %1814 = vmatprep.subr.bf16.mxu0 0
    %1815 = vmatpush1.bf16.msra.mxu0 %v1776
    %1816 = vmatprep.subr.bf16.mxu0 0
    %1817 = vmatpush1.bf16.msra.mxu0 %v1777
    %1818 = vmatprep.subr.bf16.mxu0 0
    %1819 = vmatpush1.bf16.msra.mxu0 %v1778
    %1820 = vmatprep.subr.bf16.mxu0 0
    %1821 = vmatpush1.bf16.msra.mxu0 %v1779
    %1822 = vmatprep.subr.bf16.mxu0 0
    %1823 = vmatpush1.bf16.msra.mxu0 %v1780
    %1824 = vmatprep.subr.bf16.mxu0 0
    %1825 = vmatpush1.bf16.msra.mxu0 %v1781
    %1826 = vmatprep.subr.bf16.mxu0 0
    %1827 = vmatpush1.bf16.msra.mxu0 %v1782
    %1828 = vmatprep.subr.bf16.mxu0 0
    %1829 = vmatpush1.bf16.msra.mxu0 %v1783
    %1830 = vmatprep.subr.bf16.mxu0 0
    %1831 = vmatpush1.bf16.msra.mxu0 %v1784
    %1832 = vmatprep.subr.bf16.mxu0 0
    %1833 = vmatpush1.bf16.msra.mxu0 %v1785
    %1834 = vmatprep.mubr.bf16.mxu0 %v1664
    %1835 = vmatmul.mubr.bf16.gmra.mrb[0].mxu0 %v1663
    %v1836 = vpop.f32.mrb[0].mxu0
    %v1837 = vadd.f32 %v1704, %v1836
    %v1838 = vpop.f32.mrb[0].mxu0
    %v1839 = vpop.f32.mrb[0].mxu0
    %v1840 = vadd.f32 %v1704, %v1839
    %v1841 = vpop.f32.mrb[0].mxu0
    %1842 = vmatprep.mubr.bf16.mxu0 %v1666
    %1843 = vmatmul.mubr.bf16.gmra.mrb[0].mxu0 %v1665
    %v1844 = vpop.f32.mrb[0].mxu0
    %v1845 = vadd.f32 %v1704, %v1844
    %v1846 = vpop.f32.mrb[0].mxu0
    %v1847 = vpop.f32.mrb[0].mxu0
    %v1848 = vadd.f32 %v1704, %v1847
    %v1849 = vpop.f32.mrb[0].mxu0
    %1850 = vdwg.mxu0
    %v1851 = vmax.f32 %v1837, 0.0
    %v1852 = vmax.f32 %v1840, 0.0
    %v1853 = vmax.f32 %v1845, 0.0
    %v1854 = vmax.f32 %v1848, 0.0
    %v1855 = vpack.c.bf16 %v1852, %v1851
    %v1856 = vpack.c.bf16 %v1854, %v1853
    %v1857 = vld [vmem:[%s13] sm:$0xf]
    %v1858 = vld [vmem:[%s13 + $0x4] sm:$0xf]
    %v1859 = vld [vmem:[%s13 + $0x8] sm:$0xf]
    %v1860 = vld [vmem:[%s13 + $0xc] sm:$0xf]
    %v1861 = vld [vmem:[%s13 + $0x10] sm:$0xf]
    %v1862 = vld [vmem:[%s13 + $0x14] sm:$0xf]
    %v1863 = vld [vmem:[%s13 + $0x18] sm:$0xf]
    %v1864 = vld [vmem:[%s13 + $0x1c] sm:$0xf]
    %v1865 = vld [vmem:[%s13 + $0x20] sm:$0xf]
    %v1866 = vld [vmem:[%s13 + $0x24] sm:$0xf]
    %v1867 = vld [vmem:[%s13 + $0x28] sm:$0xf]
    %v1868 = vld [vmem:[%s13 + $0x2c] sm:$0xf]
    %v1869 = vld [vmem:[%s13 + $0x30] sm:$0xf]
    %v1870 = vld [vmem:[%s13 + $0x34] sm:$0xf]
    %v1871 = vld [vmem:[%s13 + $0x38] sm:$0xf]
    %v1872 = vld [vmem:[%s13 + $0x3c] sm:$0xf]
    %v1873 = vld [vmem:[%s14] sm:$0x1]
    %v1875 = vlaneseq
    %v1876 = vshrl.u32 %v1875, 7
    %v1877 = vsub.s32 0, %v1876
    %v1878 = vrot.slane %v1873, %v1877
    %v1896 = vunpack.c.l.b16 %v1857
    %v1897 = vunpack.c.l.b16 %v1858
    %v1898 = vunpack.c.l.b16 %v1859
    %v1899 = vunpack.c.l.b16 %v1860
    %v1900 = vunpack.c.l.b16 %v1861
    %v1901 = vunpack.c.l.b16 %v1862
    %v1902 = vunpack.c.l.b16 %v1863
    %v1903 = vunpack.c.l.b16 %v1864
    %v1904 = vunpack.c.l.b16 %v1865
    %v1905 = vunpack.c.l.b16 %v1866
    %v1906 = vunpack.c.l.b16 %v1867
    %v1907 = vunpack.c.l.b16 %v1868
    %v1908 = vunpack.c.l.b16 %v1869
    %v1909 = vunpack.c.l.b16 %v1870
    %v1910 = vunpack.c.l.b16 %v1871
    %v1911 = vunpack.c.l.b16 %v1872
    %v1912 = vpack.c.b16 %v1897, %v1896
    %v1913 = vpack.c.b16 %v1899, %v1898
    %v1914 = vpack.c.b16 %v1901, %v1900
    %v1915 = vpack.c.b16 %v1903, %v1902
    %v1916 = vpack.c.b16 %v1905, %v1904
    %v1917 = vpack.c.b16 %v1907, %v1906
    %v1918 = vpack.c.b16 %v1909, %v1908
    %v1919 = vpack.c.b16 %v1911, %v1910
    %1928 = vmatprep.subr.bf16.mxu0 0
    %1929 = vmatpush1.bf16.msra.mxu0 %v1912
    %1930 = vmatprep.subr.bf16.mxu0 0
    %1931 = vmatpush1.bf16.msra.mxu0 %v1913
    %1932 = vmatprep.subr.bf16.mxu0 0
    %1933 = vmatpush1.bf16.msra.mxu0 %v1914
    %1934 = vmatprep.subr.bf16.mxu0 0
    %1935 = vmatpush1.bf16.msra.mxu0 %v1915
    %1936 = vmatprep.subr.bf16.mxu0 0
    %1937 = vmatpush1.bf16.msra.mxu0 %v1916
    %1938 = vmatprep.subr.bf16.mxu0 0
    %1939 = vmatpush1.bf16.msra.mxu0 %v1917
    %1940 = vmatprep.subr.bf16.mxu0 0
    %1941 = vmatpush1.bf16.msra.mxu0 %v1918
    %1942 = vmatprep.subr.bf16.mxu0 0
    %1943 = vmatpush1.bf16.msra.mxu0 %v1919
    %1944 = vmatprep.subr.bf16.mxu0 0
    %1945 = vmatpush1.bf16.msra.mxu0 0
    %1946 = vmatprep.subr.bf16.mxu0 0
    %1947 = vmatpush1.bf16.msra.mxu0 0
    %1948 = vmatprep.subr.bf16.mxu0 0
    %1949 = vmatpush1.bf16.msra.mxu0 0
    %1950 = vmatprep.subr.bf16.mxu0 0
    %1951 = vmatpush1.bf16.msra.mxu0 0
    %1952 = vmatprep.subr.bf16.mxu0 0
    %1953 = vmatpush1.bf16.msra.mxu0 0
    %1954 = vmatprep.subr.bf16.mxu0 0
    %1955 = vmatpush1.bf16.msra.mxu0 0
    %1956 = vmatprep.subr.bf16.mxu0 0
    %1957 = vmatpush1.bf16.msra.mxu0 0
    %1958 = vmatprep.subr.bf16.mxu0 0
    %1959 = vmatpush1.bf16.msra.mxu0 0
    %1960 = vmatprep.mubr.bf16.mxu0 0
    %1961 = vmatmul.mubr.bf16.gmra.mrb[0].mxu0 %v1855
    %v1962 = vpop.f32.mrb[0].mxu0
    %v1963 = vadd.f32 %v1878, %v1962
    %v1964 = vpop.f32.mrb[0].mxu0
    %v1965 = vpop.f32.mrb[0].mxu0
    %v1966 = vadd.f32 %v1878, %v1965
    %v1967 = vpop.f32.mrb[0].mxu0
    %1968 = vmatprep.mubr.bf16.mxu0 0
    %1969 = vmatmul.mubr.bf16.gmra.mrb[0].mxu0 %v1856
    %v1970 = vpop.f32.mrb[0].mxu0
    %v1971 = vadd.f32 %v1878, %v1970
    %v1972 = vpop.f32.mrb[0].mxu0
    %v1973 = vpop.f32.mrb[0].mxu0
    %v1974 = vadd.f32 %v1878, %v1973
    %v1975 = vpop.f32.mrb[0].mxu0
    %1976 = vdwg.mxu0
    %vm1977 = vcmask 48128
    %v1978 = vsel %vm1977, %v1963, -inf
    %1979 = vmax.xlane.f32.xlu0 %v1978
    %v1980 = vpop.xlane.xlu0 %1979
    %v1981 = vsel %vm1977, %v1966, -inf
    %1982 = vmax.xlane.f32.xlu0 %v1981
    %v1983 = vpop.xlane.xlu0 %1982
    %v1984 = vsel %vm1977, %v1971, -inf
    %1985 = vmax.xlane.f32.xlu0 %v1984
    %v1986 = vpop.xlane.xlu0 %1985
    %v1987 = vsel %vm1977, %v1974, -inf
    %1988 = vmax.xlane.f32.xlu0 %v1987
    %v1989 = vpop.xlane.xlu0 %1988
    %v1990 = vsub.f32 %v1963, %v1980
    %v1991 = vsub.f32 %v1966, %v1983
    %v1992 = vsub.f32 %v1971, %v1986
    %v1993 = vsub.f32 %v1974, %v1989
    %v1994 = vmul.f32 %v1990, 1.442695
    %v1995 = vpow.pop %v1994
    %v1996 = vmul.f32 %v1991, 1.442695
    %v1997 = vpow.pop %v1996
    %v1998 = vmul.f32 %v1992, 1.442695
    %v1999 = vpow.pop %v1998
    %v2000 = vmul.f32 %v1993, 1.442695
    %v2001 = vpow.pop %v2000
    %v2002 = vsel %vm1977, %v1995, 0.0
    %2003 = vadd.xlane.f32.xlu0 %v2002
    %v2004 = vpop.xlane.xlu0 %2003
    %v2005 = vsel %vm1977, %v1997, 0.0
    %2006 = vadd.xlane.f32.xlu0 %v2005
    %v2007 = vpop.xlane.xlu0 %2006
    %v2008 = vsel %vm1977, %v1999, 0.0
    %2009 = vadd.xlane.f32.xlu0 %v2008
    %v2010 = vpop.xlane.xlu0 %2009
    %v2011 = vsel %vm1977, %v2001, 0.0
    %2012 = vadd.xlane.f32.xlu0 %v2011
    %v2013 = vpop.xlane.xlu0 %2012
    %v2014 = vlog2.pop %v2004
    %v2015 = vmul.f32 %v2014, 0.6931472
    %v2016 = vlog2.pop %v2007
    %v2017 = vmul.f32 %v2016, 0.6931472
    %v2018 = vlog2.pop %v2010
    %v2019 = vmul.f32 %v2018, 0.6931472
    %v2020 = vlog2.pop %v2013
    %v2021 = vmul.f32 %v2020, 0.6931472
    %v2022 = vsub.f32 %v1990, %v2015
    %v2023 = vsub.f32 %v1991, %v2017
    %v2024 = vsub.f32 %v1992, %v2019
    %v2025 = vsub.f32 %v1993, %v2021
    %2026 = vst.msk [vmem:[%s17] sm:$0xff] %vm1977, %v2022
    %2027 = vst.msk [vmem:[%s17 + $0x8] sm:$0xff] %vm1977, %v2023
    %2028 = vst.msk [vmem:[%s17 + $0x10] sm:$0xff] %vm1977, %v2024
    %2029 = vst.msk [vmem:[%s17 + $0x18] sm:$0xff] %vm1977, %v2025
    %vm2030 = vcmask 7168
    %v2031 = vsel %vm2030, %v733, -inf
    %v2032 = vsel %vm2030, %v734, -inf
    %v2033 = vmax.f32 %v2031, %v2032
    %v2034 = vrot.slane %v2033, 4
    %v2035 = vmax.f32 %v2033, %v2034
    %v2036 = vrot.slane %v2035, 2
    %v2037 = vmax.f32 %v2035, %v2036
    %v2038 = vrot.slane %v2037, 1
    %v2039 = vmax.f32 %v2037, %v2038
    %v2040 = vsel %vm2030, %v735, -inf
    %v2041 = vsel %vm2030, %v736, -inf
    %v2042 = vmax.f32 %v2040, %v2041
    %v2043 = vrot.slane %v2042, 4
    %v2044 = vmax.f32 %v2042, %v2043
    %v2045 = vrot.slane %v2044, 2
    %v2046 = vmax.f32 %v2044, %v2045
    %v2047 = vrot.slane %v2046, 1
    %v2048 = vmax.f32 %v2046, %v2047
    %v2049 = vsub.f32 %v733, %v2039
    %v2050 = vsub.f32 %v734, %v2039
    %v2051 = vsub.f32 %v735, %v2048
    %v2052 = vsub.f32 %v736, %v2048
    %v2053 = vmul.f32 %v2049, 1.442695
    %v2054 = vpow.pop %v2053
    %v2055 = vmul.f32 %v2050, 1.442695
    %v2056 = vpow.pop %v2055
    %v2057 = vmul.f32 %v2051, 1.442695
    %v2058 = vpow.pop %v2057
    %v2059 = vmul.f32 %v2052, 1.442695
    %v2060 = vpow.pop %v2059
    %v2061 = vsel %vm2030, %v2054, 0.0
    %v2062 = vsel %vm2030, %v2056, 0.0
    %v2063 = vadd.f32 %v2061, %v2062
    %v2064 = vrot.slane %v2063, 4
    %v2065 = vadd.f32 %v2063, %v2064
    %v2066 = vrot.slane %v2065, 2
    %v2067 = vadd.f32 %v2065, %v2066
    %v2068 = vrot.slane %v2067, 1
    %v2069 = vadd.f32 %v2067, %v2068
    %v2070 = vsel %vm2030, %v2058, 0.0
    %v2071 = vsel %vm2030, %v2060, 0.0
    %v2072 = vadd.f32 %v2070, %v2071
    %v2073 = vrot.slane %v2072, 4
    %v2074 = vadd.f32 %v2072, %v2073
    %v2075 = vrot.slane %v2074, 2
    %v2076 = vadd.f32 %v2074, %v2075
    %v2077 = vrot.slane %v2076, 1
    %v2078 = vadd.f32 %v2076, %v2077
    %v2079 = vlog2.pop %v2069
    %v2080 = vmul.f32 %v2079, 0.6931472
    %v2081 = vlog2.pop %v2078
    %v2082 = vmul.f32 %v2081, 0.6931472
    %v2083 = vsub.f32 %v2049, %v2080
    %v2084 = vsub.f32 %v2050, %v2080
    %v2085 = vsub.f32 %v2051, %v2082
    %v2086 = vsub.f32 %v2052, %v2082
    %v2087 = vmul.f32 %v2083, 1.442695
    %v2088 = vpow.pop %v2087
    %v2089 = vmul.f32 %v2084, 1.442695
    %v2090 = vpow.pop %v2089
    %v2091 = vmul.f32 %v2085, 1.442695
    %v2092 = vpow.pop %v2091
    %v2093 = vmul.f32 %v2086, 1.442695
    %v2094 = vpow.pop %v2093
    %2096 = vset.pattern.permute.xlu0 0
    %2097 = vperm.xlu0 %2096, %v2088
    %v2098 = vpop.permute.xlu0 %2097
    %2101 = vset.pattern.permute.xlu0 0
    %2102 = vperm.xlu0 %2101, %v2090
    %v2103 = vpop.permute.xlu0 %2102
    %2106 = vset.pattern.permute.xlu0 0
    %2107 = vperm.xlu0 %2106, %v2092
    %v2108 = vpop.permute.xlu0 %2107
    %2111 = vset.pattern.permute.xlu0 0
    %2112 = vperm.xlu0 %2111, %v2094
    %v2113 = vpop.permute.xlu0 %2112
    %v2115 = vmul.f32 %v2098, %v1963
    %v2116 = vmul.f32 %v2103, %v1966
    %v2117 = vmul.f32 %v2108, %v1971
    %v2118 = vmul.f32 %v2113, %v1974
    %v2119 = vsel %vm1977, %v2115, 0.0
    %v2120 = vsel %vm1977, %v2116, 0.0
    %v2121 = vadd.f32 %v2119, %v2120
    %v2122 = vrot.slane %v2121, 4
    %v2123 = vadd.f32 %v2121, %v2122
    %v2124 = vrot.slane %v2123, 2
    %v2125 = vadd.f32 %v2123, %v2124
    %v2126 = vrot.slane %v2125, 1
    %v2127 = vadd.f32 %v2125, %v2126
    %v2128 = vsel %vm1977, %v2117, 0.0
    %v2129 = vsel %vm1977, %v2118, 0.0
    %v2130 = vadd.f32 %v2128, %v2129
    %v2131 = vrot.slane %v2130, 4
    %v2132 = vadd.f32 %v2130, %v2131
    %v2133 = vrot.slane %v2132, 2
    %v2134 = vadd.f32 %v2132, %v2133
    %v2135 = vrot.slane %v2134, 1
    %v2136 = vadd.f32 %v2134, %v2135
    %vm2139 = vcmask 1041409
    %v2140 = vsel %vm2139, %v2136, %v2127
    %vm2142 = vcmask 41984
    %v2143 = vsel %vm2142, %v2140, -inf
    %2144 = vmax.xlane.f32.xlu0 %v2143
    %v2145 = vpop.xlane.xlu0 %2144
    %v2147 = vrot.slane %v2145, 1
    %v2150 = vsub.f32 %v2127, %v2145
    %v2151 = vsub.f32 %v2136, %v2147
    %v2152 = vmul.f32 %v2150, 1.442695
    %v2153 = vpow.pop %v2152
    %v2154 = vmul.f32 %v2151, 1.442695
    %v2155 = vpow.pop %v2154
    %v2158 = vrot.slane %v2155, 7
    %v2159 = vsel %vm2139, %v2158, %v2153
    %v2161 = vsel %vm2142, %v2159, 0.0
    %2162 = vadd.xlane.f32.xlu0 %v2161
    %v2163 = vpop.xlane.xlu0 %2162
    %v2164 = vlog2.pop %v2163
    %v2165 = vmul.f32 %v2164, 0.6931472
    %v2167 = vrot.slane %v2165, 1
    %v2170 = vsub.f32 %v2150, %v2165
    %v2171 = vsub.f32 %v2151, %v2167
    %v2174 = vrot.slane %v2171, 7
    %v2175 = vsel %vm2139, %v2174, %v2170
    %2177 = vst.msk [vmem:[#allocation17] sm:$0x3] %vm2142, %v2175
    %v2178 = vmul.f32 %v2088, %v2083
    %v2179 = vmul.f32 %v2090, %v2084
    %v2180 = vmul.f32 %v2092, %v2085
    %v2181 = vmul.f32 %v2094, %v2086
    %v2182 = vsel %vm2030, %v2178, 0.0
    %v2183 = vsel %vm2030, %v2179, 0.0
    %v2184 = vadd.f32 %v2182, %v2183
    %v2185 = vrot.slane %v2184, 4
    %v2186 = vadd.f32 %v2184, %v2185
    %v2187 = vrot.slane %v2186, 2
    %v2188 = vadd.f32 %v2186, %v2187
    %v2189 = vrot.slane %v2188, 1
    %v2190 = vadd.f32 %v2188, %v2189
    %v2191 = vsel %vm2030, %v2180, 0.0
    %v2192 = vsel %vm2030, %v2181, 0.0
    %v2193 = vadd.f32 %v2191, %v2192
    %v2194 = vrot.slane %v2193, 4
    %v2195 = vadd.f32 %v2193, %v2194
    %v2196 = vrot.slane %v2195, 2
    %v2197 = vadd.f32 %v2195, %v2196
    %v2198 = vrot.slane %v2197, 1
    %v2199 = vadd.f32 %v2197, %v2198
    %v2202 = vsel %vm2139, %v2199, %v2190
    %vm2204 = vcmask 1024
    %2205 = vst.msk [vmem:[%s16] sm:$0x3] %vm2204, %v2202
    // Predicated region
    $region94: #{tpu_custom_call.1} parent=1 // pred_check
      _
    $region95: #{tpu_custom_call.1} parent=1 // pred_check_branch
      %2207 = sbr.rel (0) target = $region97
    $region96: #{tpu_custom_call.1} parent=1 // pred_region
      %s2209 = ssub.s32 32, 32
      %2210 = vsyncadd [#allocation5], %s2209
      %s2212 = sshll.u32 [#allocation17], 4
      %s2213 = int_to_ptr.vmem [resolvable:$true] %s2212
      %2215 = dma.vmem_to_hbm [thread:$0]  %s2213, 32, %s15, [#allocation5]
    $region97: #{tpu_custom_call.1} parent=1 // pred_fallthru
      _
    // Predicated region
    $region98: #{tpu_custom_call.1} parent=1 // pred_check
      _
    $region99: #{tpu_custom_call.1} parent=1 // pred_check_branch
      %2217 = sbr.rel (0) target = $region101
    $region100: #{tpu_custom_call.1} parent=1 // pred_region
      _
    $region101: #{tpu_custom_call.1} parent=1 // pred_fallthru
      _
    // Predicated region
    $region102: #{tpu_custom_call.1} parent=1 // pred_check
      _
    $region103: #{tpu_custom_call.1} parent=1 // pred_check_branch
      %2219 = sbr.rel (0) target = $region105
    $region104: #{tpu_custom_call.1} parent=1 // pred_region
      _
    $region105: #{tpu_custom_call.1} parent=1 // pred_fallthru
      _
    // Predicated region
    $region106: #{tpu_custom_call.1} parent=1 // pred_check
      _
    $region107: #{tpu_custom_call.1} parent=1 // pred_check_branch
      %2221 = sbr.rel (0) target = $region109
    $region108: #{tpu_custom_call.1} parent=1 // pred_region
      %2222 = dma.done [#allocation5], 32
    $region109: #{tpu_custom_call.1} parent=1 // pred_fallthru
      _
    // Predicated region
    $region110: #{tpu_custom_call.1} parent=1 // pred_check
      _
    $region111: #{tpu_custom_call.1} parent=1 // pred_check_branch
      %2224 = sbr.rel (0) target = $region113
    $region112: #{tpu_custom_call.1} parent=1 // pred_region
      _
    $region113: #{tpu_custom_call.1} parent=1 // pred_fallthru
      _
    // Predicated region
    $region114: #{tpu_custom_call.1} parent=1 // pred_check
      _
    $region115: #{tpu_custom_call.1} parent=1 // pred_check_branch
      %2226 = sbr.rel (0) target = $region117
    $region116: #{tpu_custom_call.1} parent=1 // pred_region
      _
    $region117: #{tpu_custom_call.1} parent=1 // pred_fallthru
      _
    %2227 = vsyncpa [#allocation4], 1
    %2228 = vsyncpa [#allocation7], 1
    %2229 = vsyncpa [#allocation10], 1
    %2230 = vsyncpa [#allocation13], 1
    %2231 = vsyncpa [#allocation16], 1
    %2232 = vsyncpa [#allocation5], 1

</llo_original>
